<compile_context>
chip_gen: v5e
topology: v5e:2x2
jax: 0.10.0
libtpu: 0.0.40
codegen_flags: <defaults>
</compile_context>

<pallas_src>
import jax
import jax.numpy as jnp
import numpy as np
from jax.experimental import pallas as pl
from jax.experimental.pallas import tpu as pltpu

NEG_SLOPE = 0.01  # nn.LeakyReLU default


def _leaky_relu(x):
    return jnp.where(x > 0, x, NEG_SLOPE * x)


def _round_up(x, m):
    return (x + m - 1) // m * m


def _pad2(a, rows, cols):
    return jnp.pad(a, ((0, rows - a.shape[0]), (0, cols - a.shape[1])))


def text_weighted_conv_kernel(text_ref,    # (Bt, Lp, wD) compute dtype
                              lens_ref,    # (Bt, 1) int32
                              w1_ref,      # (wD, hDp)      cd
                              w0_ref,      # (wD, hDp)      cd
                              wc_ref,      # (hDp, hDp+128) cd  [Wfc_c | watt_c^T]
                              wx_ref,      # (wD,  hDp+128) cd  [Wfc_x | watt_x^T]
                              bconv_ref,   # (1, hDp) f32
                              bfc_ref,     # (1, hDp) f32
                              batt_ref,    # (1, 1)   f32
                              out_ref):    # (Bt, hDp) f32
    x3 = text_ref[...]                               # (Bt, Lp, wD)
    Bt, Lp, _ = x3.shape
    hDp = out_ref.shape[-1]
    M = Bt * Lp
    x = x3.reshape(M, x3.shape[-1])                  # layout no-op (Lp granule-padded)

    # Conv1d(wD,hD,2,padding=1)[...,:-1]: conv[t] = x[t]@W1 + x[t-1]@W0 + b.
    # Two dots sharing the LHS; the tap shift is applied to the x@W0 OUTPUT.
    y1 = jnp.dot(x, w1_ref[...], preferred_element_type=jnp.float32)
    y0 = jnp.dot(x, w0_ref[...], preferred_element_type=jnp.float32)
    seq_pos = jax.lax.broadcasted_iota(jnp.int32, (M, 1), 0) % Lp
    y0_prev = jnp.where(seq_pos != 0, pltpu.roll(y0, shift=1, axis=0), 0.0)
    conv = _leaky_relu(y1 + y0_prev + bconv_ref[...])          # (M, hDp) f32
    # TODO(synk): Dropout(0.2) layers are identity in eval mode; not implemented.

    # fc(concat([conv, text])) and att(concat([conv, text])) fused: the RHS
    # carries an extra lane block whose first column is the att projection.
    pre = (jnp.dot(conv.astype(x.dtype), wc_ref[...],
                   preferred_element_type=jnp.float32)
           + jnp.dot(x, wx_ref[...], preferred_element_type=jnp.float32))
    pre3 = pre.reshape(Bt, Lp, pre.shape[-1])                  # (Bt, Lp, hDp+128)
    feat = _leaky_relu(pre3[:, :, :hDp] + bfc_ref[...])        # (Bt, Lp, hDp) f32
    logits = pre3[:, :, hDp:hDp + 1] + batt_ref[...]           # (Bt, Lp, 1)   f32

    # per-example valid-length mask (single vector compare, no scalar chain)
    pos3 = jax.lax.broadcasted_iota(jnp.int32, (Bt, Lp, 1), 1)
    valid3 = pos3 < lens_ref[...].reshape(Bt, 1, 1)

    # masked softmax over valid positions plus the F.pad zero-logit "sink"
    # column (mask forced to 1); its probability mass is discarded, matching
    # con_att[:, 1:]. att == 0 at masked rows, which also zeroes feat there.
    logits = jnp.where(valid3, logits, jnp.float32(-1e30))
    m = jnp.maximum(jnp.max(logits, axis=1, keepdims=True),
                    jnp.float32(0.0))                          # (Bt, 1, 1)
    e = jnp.where(valid3, jnp.exp(logits - m), 0.0)            # (Bt, Lp, 1)
    denom = jnp.sum(e, axis=1, keepdims=True) + jnp.exp(0.0 - m)
    att = e * (1.0 / denom)                                    # exact reciprocal

    out_ref[...] = jnp.sum(feat * att, axis=1).astype(out_ref.dtype)


def _tpu_vmem_and_cores():
    """(VMEM capacity bytes, has-two-TensorCores) with safe fallbacks."""
    vmem_cap = 64 << 20                      # conservative default (v7x per-TC)
    try:
        vmem_cap = int(pltpu.get_tpu_info().vmem_capacity_bytes)
    except Exception:
        pass
    two_tc = False
    try:
        kind = jax.devices()[0].device_kind.lower()
        two_tc = ("v7" in kind) or ("7x" in kind)
    except Exception:
        pass
    return vmem_cap, two_tc


def _vmem_estimate(btile, Lp, wD, hDp, itemsize):
    """Per-step VMEM: double-buffered I/O blocks, weights, f32 temporaries."""
    M = btile * Lp
    n_ext = hDp + 128
    io = 2 * (M * wD * itemsize + btile * 4 + btile * hDp * 4)
    weights = 2 * ((2 * wD * hDp + hDp * n_ext + wD * n_ext) * itemsize
                   + (2 * hDp + 1) * 4)
    temps = M * 4 * (6 * hDp + n_ext + 4) + M * hDp * itemsize
    return io + weights + temps


def _choose_btile(B, Lp, wD, hDp, itemsize, vmem_budget, two_tc,
                  target_rows=1024):
    """Examples per grid step (multiple of 8): biggest tile that fits VMEM,
    targeting ~1024 flattened rows per step. Only v7x prefers >= 2 steps."""
    b_pad = _round_up(max(B, 1), 8)
    btile = 8
    while (btile * 2 <= b_pad and btile * Lp < target_rows
           and _vmem_estimate(btile * 2, Lp, wD, hDp, itemsize) <= vmem_budget):
        btile *= 2
    if two_tc:
        # v7x: 2 TensorCores share the "parallel" grid axis -> keep >= 2 steps.
        while b_pad // btile < 2 and btile > 8:
            btile //= 2
    return btile


def text_weighted_conv(text, text_lengths, params, *,
                       compute_dtype=jnp.bfloat16, btile=None):
    text = jnp.asarray(text, jnp.float32)
    B, L, wD = text.shape
    hD = params["bconv"].shape[-1]
    hDp = _round_up(hD, 128)
    n_ext = hDp + 128
    cd = jnp.dtype(compute_dtype)
    itemsize = cd.itemsize
    sub = {4: 8, 2: 16, 1: 32}.get(itemsize, 8)      # dtype-aware sublane granule
    Lp = _round_up(L, sub)

    vmem_cap, two_tc = _tpu_vmem_and_cores()
    if btile is None:
        btile = _choose_btile(B, Lp, wD, hDp, itemsize,
                              vmem_budget=int(0.4 * vmem_cap), two_tc=two_tc)
    Bp = _round_up(B, btile)
    grid = (Bp // btile,)

    # Inputs: word dim stays un-padded in HBM; pad batch / length only.
    # NOTE: the bf16 path quantizes the text/conv operands feeding the
    # attention logits (covered by the looser bf16 tolerance).
    text_p = jnp.pad(text.astype(cd), ((0, Bp - B), (0, Lp - L), (0, 0)))
    lens_p = jnp.pad(jnp.asarray(text_lengths, jnp.int32),
                     (0, Bp - B)).reshape(Bp, 1)

    # Weights: conv taps as two shared-LHS RHS matrices; fc + att fused into
    # one widened RHS whose column hDp carries the attention projection.
    f32 = jnp.float32
    w1 = _pad2(jnp.asarray(params["w1"], f32), wD, hDp).astype(cd)
    w0 = _pad2(jnp.asarray(params["w0"], f32), wD, hDp).astype(cd)
    wc_ext = jnp.zeros((hDp, n_ext), f32)
    wc_ext = wc_ext.at[:hD, :hD].set(jnp.asarray(params["wfc_c"], f32))
    wc_ext = wc_ext.at[:hD, hDp].set(jnp.asarray(params["watt_c"], f32)[0])
    wc_ext = wc_ext.astype(cd)
    wx_ext = jnp.zeros((wD, n_ext), f32)
    wx_ext = wx_ext.at[:, :hD].set(jnp.asarray(params["wfc_x"], f32))
    wx_ext = wx_ext.at[:, hDp].set(jnp.asarray(params["watt_x"], f32)[0])
    wx_ext = wx_ext.astype(cd)
    bconv = _pad2(jnp.asarray(params["bconv"], f32), 1, hDp)
    bfc = _pad2(jnp.asarray(params["bfc"], f32), 1, hDp)
    batt = jnp.asarray(params["batt"], f32).reshape(1, 1)

    vmem_need = _vmem_estimate(btile, Lp, wD, hDp, itemsize)
    vmem_limit = int(min(max(int(1.5 * vmem_need), 16 << 20),
                         int(0.75 * vmem_cap)))

    grid_spec = pltpu.PrefetchScalarGridSpec(
        num_scalar_prefetch=0,
        grid=grid,
        in_specs=[
            pl.BlockSpec((btile, Lp, wD), lambda b: (b, 0, 0)),   # text
            pl.BlockSpec((btile, 1), lambda b: (b, 0)),           # lens
            pl.BlockSpec((wD, hDp), lambda b: (0, 0)),            # w1
            pl.BlockSpec((wD, hDp), lambda b: (0, 0)),            # w0
            pl.BlockSpec((hDp, n_ext), lambda b: (0, 0)),         # wc_ext
            pl.BlockSpec((wD, n_ext), lambda b: (0, 0)),          # wx_ext
            pl.BlockSpec((1, hDp), lambda b: (0, 0)),             # bconv
            pl.BlockSpec((1, hDp), lambda b: (0, 0)),             # bfc
            pl.BlockSpec((1, 1), lambda b: (0, 0)),               # batt
        ],
        out_specs=pl.BlockSpec((btile, hDp), lambda b: (b, 0)),
    )

    out = pl.pallas_call(
        text_weighted_conv_kernel,
        out_shape=jax.ShapeDtypeStruct((Bp, hDp), jnp.float32),
        grid_spec=grid_spec,
        compiler_params=pltpu.CompilerParams(
            dimension_semantics=("parallel",),
            vmem_limit_bytes=vmem_limit),
    )(text_p, lens_p, w1, w0, wc_ext, wx_ext, bconv, bfc, batt)

    return out[:B, :hD]


def reference(text, text_lengths, p):
    """Pure-JAX reference reproducing the PyTorch forward (eval mode)."""
    B, L, wD = text.shape
    lens = jnp.asarray(text_lengths, jnp.int32)
    x_prev = jnp.concatenate(
        [jnp.zeros((B, 1, wD), jnp.float32), text[:, :-1, :]], axis=1)
    conv = _leaky_relu(text @ p["w1"] + x_prev @ p["w0"] + p["bconv"])
    feat = _leaky_relu(conv @ p["wfc_c"] + text @ p["wfc_x"] + p["bfc"])
    mask = (jnp.arange(L)[None, :] < lens[:, None]).astype(jnp.float32)
    feat = feat * mask[:, :, None]
    logits = (jnp.sum(conv * p["watt_c"][None], axis=-1)
              + jnp.sum(text * p["watt_x"][None], axis=-1) + p["batt"][0, 0])
    logits = jnp.where(mask > 0, logits, -1e30)
    padded = jnp.concatenate([jnp.zeros((B, 1), jnp.float32), logits], axis=1)
    att = jax.nn.softmax(padded, axis=-1)[:, 1:]
    return jnp.sum(feat * att[:, :, None], axis=1)


def init_params(key, word_dim, hidden_dim):
    ks = jax.random.split(key, 8)
    s = 0.1
    return {
        "w0": s * jax.random.normal(ks[0], (word_dim, hidden_dim), jnp.float32),
        "w1": s * jax.random.normal(ks[1], (word_dim, hidden_dim), jnp.float32),
        "bconv": s * jax.random.normal(ks[2], (1, hidden_dim), jnp.float32),
        "wfc_c": s * jax.random.normal(ks[3], (hidden_dim, hidden_dim), jnp.float32),
        "wfc_x": s * jax.random.normal(ks[4], (word_dim, hidden_dim), jnp.float32),
        "bfc": s * jax.random.normal(ks[5], (1, hidden_dim), jnp.float32),
        "watt_c": s * jax.random.normal(ks[6], (1, hidden_dim), jnp.float32),
        "watt_x": s * jax.random.normal(ks[7], (1, word_dim), jnp.float32),
        "batt": jnp.zeros((1, 1), jnp.float32),
    }


if __name__ == "__main__":
    B, L, word_dim, hidden_dim = 11, 8, 32, 32
    key = jax.random.PRNGKey(0)
    k_text, k_params = jax.random.split(key)
    text = jax.random.normal(k_text, (B, L, word_dim), jnp.float32)
    text_lengths = [8, 5, 1, 7, 3, 8, 2, 6, 4, 8, 5]
    params = init_params(k_params, word_dim, hidden_dim)

    ref = reference(text, text_lengths, params)

    # f32 path (tight-precision check)
    out_f32 = jax.block_until_ready(
        text_weighted_conv(text, text_lengths, params,
                           compute_dtype=jnp.float32))
    np.testing.assert_allclose(np.asarray(out_f32), np.asarray(ref),
                               rtol=1e-4, atol=2e-4)

    # bf16 MXU-operand / HBM-traffic path (default; looser check)
    out_bf16 = jax.block_until_ready(
        text_weighted_conv(text, text_lengths, params,
                           compute_dtype=jnp.bfloat16))
    np.testing.assert_allclose(np.asarray(out_bf16), np.asarray(ref),
                               rtol=8e-2, atol=8e-2)

    print("KERNEL_OK")
</pallas_src>

<mosaic_0001>
module attributes {stable_mosaic.version = 11 : i64} {
  func.func @text_weighted_conv_kernel(%arg0: i32, %arg1: memref<16x8x32xf32, #tpu.memory_space<vmem>>, %arg2: memref<16x1xi32, #tpu.memory_space<vmem>>, %arg3: memref<32x128xf32, #tpu.memory_space<vmem>>, %arg4: memref<32x128xf32, #tpu.memory_space<vmem>>, %arg5: memref<128x256xf32, #tpu.memory_space<vmem>>, %arg6: memref<32x256xf32, #tpu.memory_space<vmem>>, %arg7: memref<1x128xf32, #tpu.memory_space<vmem>>, %arg8: memref<1x128xf32, #tpu.memory_space<vmem>>, %arg9: memref<1x1xf32, #tpu.memory_space<vmem>>, %arg10: memref<16x128xf32, #tpu.memory_space<vmem>>) attributes {dimension_semantics = [#tpu.dimension_semantics<parallel>], iteration_bounds = array<i64: 1>, scalar_prefetch = 0 : i64, scratch_operands = 0 : i64, tpu.core_type = #tpu.core_type<tc>, window_params = [{transform_indices = @transform_0, window_bounds = array<i64: 16, 8, 32>}, {transform_indices = @transform_1, window_bounds = array<i64: 16, 1>}, {pipeline_mode = #tpu.pipeline_mode<synchronous>, transform_indices = @transform_2, window_bounds = array<i64: 32, 128>}, {pipeline_mode = #tpu.pipeline_mode<synchronous>, transform_indices = @transform_3, window_bounds = array<i64: 32, 128>}, {pipeline_mode = #tpu.pipeline_mode<synchronous>, transform_indices = @transform_4, window_bounds = array<i64: 128, 256>}, {pipeline_mode = #tpu.pipeline_mode<synchronous>, transform_indices = @transform_5, window_bounds = array<i64: 32, 256>}, {pipeline_mode = #tpu.pipeline_mode<synchronous>, transform_indices = @transform_6, window_bounds = array<i64: 1, 128>}, {pipeline_mode = #tpu.pipeline_mode<synchronous>, transform_indices = @transform_7, window_bounds = array<i64: 1, 128>}, {pipeline_mode = #tpu.pipeline_mode<synchronous>, transform_indices = @transform_8, window_bounds = array<i64: 1, 1>}, {transform_indices = @transform_9, window_bounds = array<i64: 16, 128>}]} {
    %c0 = arith.constant 0 : index
    %c0_0 = arith.constant 0 : index
    %c0_1 = arith.constant 0 : index
    %0 = vector.load %arg1[%c0, %c0_0, %c0_1] : memref<16x8x32xf32, #tpu.memory_space<vmem>>, vector<16x8x32xf32>
    %1 = vector.shape_cast %0 : vector<16x8x32xf32> to vector<128x32xf32>
    %c0_2 = arith.constant 0 : index
    %c0_3 = arith.constant 0 : index
    %2 = vector.load %arg3[%c0_2, %c0_3] : memref<32x128xf32, #tpu.memory_space<vmem>>, vector<32x128xf32>
    %cst = arith.constant dense<0.000000e+00> : vector<128x128xf32>
    %3 = tpu.matmul %1, %2, %cst {dimension_numbers = #tpu.dot_dimension_numbers<[1], [0], [0], [1], [0, 0, 1, 1], [], []>} : vector<128x32xf32>, vector<32x128xf32>, vector<128x128xf32> -> vector<128x128xf32>
    %c0_4 = arith.constant 0 : index
    %c0_5 = arith.constant 0 : index
    %4 = vector.load %arg4[%c0_4, %c0_5] : memref<32x128xf32, #tpu.memory_space<vmem>>, vector<32x128xf32>
    %cst_6 = arith.constant dense<0.000000e+00> : vector<128x128xf32>
    %5 = tpu.matmul %1, %4, %cst_6 {dimension_numbers = #tpu.dot_dimension_numbers<[1], [0], [0], [1], [0, 0, 1, 1], [], []>} : vector<128x32xf32>, vector<32x128xf32>, vector<128x128xf32> -> vector<128x128xf32>
    %6 = tpu.iota {dimensions = array<i32: 0>} : vector<128x1xi32>
    %c8_i32 = arith.constant 8 : i32
    %c0_i32 = arith.constant 0 : i32
    %7 = arith.cmpi eq, %c8_i32, %c0_i32 : i32
    %c1_i32 = arith.constant 1 : i32
    %8 = arith.select %7, %c1_i32, %c8_i32 : i32
    %9 = vector.broadcast %8 : i32 to vector<128x1xi32>
    %10 = arith.remsi %6, %9 : vector<128x1xi32>
    %c0_i32_7 = arith.constant 0 : i32
    %11 = vector.broadcast %c0_i32_7 : i32 to vector<128x1xi32>
    %12 = arith.cmpi ne, %10, %11 : vector<128x1xi32>
    %c0_i32_8 = arith.constant 0 : i32
    %13 = vector.broadcast %c0_i32_8 : i32 to vector<128x1xi32>
    %14 = arith.cmpi slt, %10, %13 : vector<128x1xi32>
    %c0_i32_9 = arith.constant 0 : i32
    %15 = arith.cmpi slt, %8, %c0_i32_9 : i32
    %16 = vector.broadcast %15 : i1 to vector<128x1xi1>
    %17 = vector.broadcast %16 : vector<128x1xi1> to vector<128x1xi1>
    %18 = arith.xori %14, %17 : vector<128x1xi1>
    %19 = arith.andi %18, %12 : vector<128x1xi1>
    %20 = vector.broadcast %8 : i32 to vector<128x1xi32>
    %21 = arith.addi %10, %20 : vector<128x1xi32>
    %22 = arith.select %19, %21, %10 : vector<128x1xi1>, vector<128x1xi32>
    %c0_i32_10 = arith.constant 0 : i32
    %23 = vector.broadcast %c0_i32_10 : i32 to vector<128x1xi32>
    %24 = arith.cmpi ne, %22, %23 : vector<128x1xi32>
    %c1_i32_11 = arith.constant 1 : i32
    %25 = tpu.dynamic_rotate %5 by %c1_i32_11 dim 0 : vector<128x128xf32>, i32 -> vector<128x128xf32>
    %cst_12 = arith.constant 0.000000e+00 : f32
    %26 = vector.shape_cast %24 : vector<128x1xi1> to vector<128x1xi1>
    %27 = vector.broadcast %26 : vector<128x1xi1> to vector<128x128xi1>
    %28 = vector.broadcast %cst_12 : f32 to vector<128x128xf32>
    %29 = arith.select %27, %25, %28 : vector<128x128xi1>, vector<128x128xf32>
    %30 = arith.addf %3, %29 : vector<128x128xf32>
    %c0_13 = arith.constant 0 : index
    %c0_14 = arith.constant 0 : index
    %31 = vector.load %arg7[%c0_13, %c0_14] : memref<1x128xf32, #tpu.memory_space<vmem>>, vector<1x128xf32>
    %32 = vector.broadcast %31 : vector<1x128xf32> to vector<128x128xf32>
    %33 = arith.addf %30, %32 : vector<128x128xf32>
    %cst_15 = arith.constant 0.000000e+00 : f32
    %34 = vector.broadcast %cst_15 : f32 to vector<128x128xf32>
    %35 = arith.cmpf ogt, %33, %34 : vector<128x128xf32>
    %cst_16 = arith.constant 0.00999999977 : f32
    %36 = vector.broadcast %cst_16 : f32 to vector<128x128xf32>
    %37 = arith.mulf %36, %33 : vector<128x128xf32>
    %38 = arith.select %35, %33, %37 : vector<128x128xi1>, vector<128x128xf32>
    %c0_17 = arith.constant 0 : index
    %c0_18 = arith.constant 0 : index
    %39 = vector.load %arg5[%c0_17, %c0_18] : memref<128x256xf32, #tpu.memory_space<vmem>>, vector<128x256xf32>
    %cst_19 = arith.constant dense<0.000000e+00> : vector<128x256xf32>
    %40 = tpu.matmul %38, %39, %cst_19 {dimension_numbers = #tpu.dot_dimension_numbers<[1], [0], [0], [1], [0, 0, 1, 1], [], []>} : vector<128x128xf32>, vector<128x256xf32>, vector<128x256xf32> -> vector<128x256xf32>
    %c0_20 = arith.constant 0 : index
    %c0_21 = arith.constant 0 : index
    %41 = vector.load %arg6[%c0_20, %c0_21] : memref<32x256xf32, #tpu.memory_space<vmem>>, vector<32x256xf32>
    %cst_22 = arith.constant dense<0.000000e+00> : vector<128x256xf32>
    %42 = tpu.matmul %1, %41, %cst_22 {dimension_numbers = #tpu.dot_dimension_numbers<[1], [0], [0], [1], [0, 0, 1, 1], [], []>} : vector<128x32xf32>, vector<32x256xf32>, vector<128x256xf32> -> vector<128x256xf32>
    %43 = arith.addf %40, %42 : vector<128x256xf32>
    %44 = vector.shape_cast %43 : vector<128x256xf32> to vector<16x8x256xf32>
    %45 = vector.extract_strided_slice %44 {offsets = [0, 0, 0], sizes = [16, 8, 128], strides = [1, 1, 1]} : vector<16x8x256xf32> to vector<16x8x128xf32>
    %c0_23 = arith.constant 0 : index
    %c0_24 = arith.constant 0 : index
    %46 = vector.load %arg8[%c0_23, %c0_24] : memref<1x128xf32, #tpu.memory_space<vmem>>, vector<1x128xf32>
    %47 = vector.shape_cast %46 : vector<1x128xf32> to vector<1x1x128xf32>
    %48 = vector.broadcast %47 : vector<1x1x128xf32> to vector<16x8x128xf32>
    %49 = arith.addf %45, %48 : vector<16x8x128xf32>
    %cst_25 = arith.constant 0.000000e+00 : f32
    %50 = vector.broadcast %cst_25 : f32 to vector<16x8x128xf32>
    %51 = arith.cmpf ogt, %49, %50 : vector<16x8x128xf32>
    %cst_26 = arith.constant 0.00999999977 : f32
    %52 = vector.broadcast %cst_26 : f32 to vector<16x8x128xf32>
    %53 = arith.mulf %52, %49 : vector<16x8x128xf32>
    %54 = arith.select %51, %49, %53 : vector<16x8x128xi1>, vector<16x8x128xf32>
    %55 = vector.extract_strided_slice %44 {offsets = [0, 0, 128], sizes = [16, 8, 1], strides = [1, 1, 1]} : vector<16x8x256xf32> to vector<16x8x1xf32>
    %c0_27 = arith.constant 0 : index
    %c0_28 = arith.constant 0 : index
    %56 = vector.load %arg9[%c0_27, %c0_28] : memref<1x1xf32, #tpu.memory_space<vmem>>, vector<1x1xf32>
    %57 = vector.shape_cast %56 : vector<1x1xf32> to vector<1x1x1xf32>
    %58 = vector.broadcast %57 : vector<1x1x1xf32> to vector<16x8x1xf32>
    %59 = arith.addf %55, %58 : vector<16x8x1xf32>
    %60 = tpu.iota {dimensions = array<i32: 1>} : vector<16x8x1xi32>
    %c0_29 = arith.constant 0 : index
    %c0_30 = arith.constant 0 : index
    %61 = vector.load %arg2[%c0_29, %c0_30] : memref<16x1xi32, #tpu.memory_space<vmem>>, vector<16x1xi32>
    %62 = vector.shape_cast %61 : vector<16x1xi32> to vector<16x1x1xi32>
    %63 = vector.broadcast %62 : vector<16x1x1xi32> to vector<16x8x1xi32>
    %64 = arith.cmpi slt, %60, %63 : vector<16x8x1xi32>
    %cst_31 = arith.constant -1.000000e+30 : f32
    %65 = vector.broadcast %cst_31 : f32 to vector<16x8x1xf32>
    %66 = arith.select %64, %59, %65 : vector<16x8x1xi1>, vector<16x8x1xf32>
    %cst_32 = arith.constant dense<0xFF800000> : vector<16x1xf32>
    %67 = vector.multi_reduction <maximumf>, %66, %cst_32 [1] : vector<16x8x1xf32> to vector<16x1xf32>
    %68 = vector.shape_cast %67 : vector<16x1xf32> to vector<16x1x1xf32>
    %cst_33 = arith.constant 0.000000e+00 : f32
    %69 = vector.broadcast %cst_33 : f32 to vector<16x1x1xf32>
    %70 = arith.maximumf %68, %69 : vector<16x1x1xf32>
    %71 = vector.broadcast %70 : vector<16x1x1xf32> to vector<16x8x1xf32>
    %72 = arith.subf %66, %71 : vector<16x8x1xf32>
    %73 = math.exp %72 : vector<16x8x1xf32>
    %cst_34 = arith.constant 0.000000e+00 : f32
    %74 = vector.broadcast %cst_34 : f32 to vector<16x8x1xf32>
    %75 = arith.select %64, %73, %74 : vector<16x8x1xi1>, vector<16x8x1xf32>
    %cst_35 = arith.constant dense<0.000000e+00> : vector<16x1xf32>
    %76 = vector.multi_reduction <add>, %75, %cst_35 [1] : vector<16x8x1xf32> to vector<16x1xf32>
    %77 = vector.shape_cast %76 : vector<16x1xf32> to vector<16x1x1xf32>
    %cst_36 = arith.constant 0.000000e+00 : f32
    %78 = vector.broadcast %cst_36 : f32 to vector<16x1x1xf32>
    %79 = arith.subf %78, %70 : vector<16x1x1xf32>
    %80 = math.exp %79 : vector<16x1x1xf32>
    %81 = arith.addf %77, %80 : vector<16x1x1xf32>
    %cst_37 = arith.constant 1.000000e+00 : f32
    %82 = vector.broadcast %cst_37 : f32 to vector<16x1x1xf32>
    %83 = arith.divf %82, %81 : vector<16x1x1xf32>
    %84 = vector.broadcast %83 : vector<16x1x1xf32> to vector<16x8x1xf32>
    %85 = arith.mulf %75, %84 : vector<16x8x1xf32>
    %86 = vector.broadcast %85 : vector<16x8x1xf32> to vector<16x8x128xf32>
    %87 = arith.mulf %54, %86 : vector<16x8x128xf32>
    %cst_38 = arith.constant dense<0.000000e+00> : vector<16x128xf32>
    %88 = vector.multi_reduction <add>, %87, %cst_38 [1] : vector<16x8x128xf32> to vector<16x128xf32>
    %c0_39 = arith.constant 0 : index
    %c0_40 = arith.constant 0 : index
    %89 = vector.load %arg10[%c0_39, %c0_40] : memref<16x128xf32, #tpu.memory_space<vmem>>, vector<16x128xf32>
    tpu.vector_store %arg10[%c0_39, %c0_40], %88 {strides = array<i32>} : memref<16x128xf32, #tpu.memory_space<vmem>>, vector<16x128xf32>,
    return
  }
  func.func @transform_0(%arg0: i32) -> (i32, i32, i32) {
    %c0_i32 = arith.constant 0 : i32
    %c0_i32_0 = arith.constant 0 : i32
    %c0_i32_1 = arith.constant 0 : i32
    return %arg0, %c0_i32, %c0_i32_0 : i32, i32, i32
  }
  func.func @transform_1(%arg0: i32) -> (i32, i32) {
    %c0_i32 = arith.constant 0 : i32
    %c0_i32_0 = arith.constant 0 : i32
    return %arg0, %c0_i32 : i32, i32
  }
  func.func @transform_2(%arg0: i32) -> (i32, i32) {
    %c0_i32 = arith.constant 0 : i32
    %c0_i32_0 = arith.constant 0 : i32
    %c0_i32_1 = arith.constant 0 : i32
    return %c0_i32, %c0_i32_0 : i32, i32
  }
  func.func @transform_3(%arg0: i32) -> (i32, i32) {
    %c0_i32 = arith.constant 0 : i32
    %c0_i32_0 = arith.constant 0 : i32
    %c0_i32_1 = arith.constant 0 : i32
    return %c0_i32, %c0_i32_0 : i32, i32
  }
  func.func @transform_4(%arg0: i32) -> (i32, i32) {
    %c0_i32 = arith.constant 0 : i32
    %c0_i32_0 = arith.constant 0 : i32
    %c0_i32_1 = arith.constant 0 : i32
    return %c0_i32, %c0_i32_0 : i32, i32
  }
  func.func @transform_5(%arg0: i32) -> (i32, i32) {
    %c0_i32 = arith.constant 0 : i32
    %c0_i32_0 = arith.constant 0 : i32
    %c0_i32_1 = arith.constant 0 : i32
    return %c0_i32, %c0_i32_0 : i32, i32
  }
  func.func @transform_6(%arg0: i32) -> (i32, i32) {
    %c0_i32 = arith.constant 0 : i32
    %c0_i32_0 = arith.constant 0 : i32
    %c0_i32_1 = arith.constant 0 : i32
    return %c0_i32, %c0_i32_0 : i32, i32
  }
  func.func @transform_7(%arg0: i32) -> (i32, i32) {
    %c0_i32 = arith.constant 0 : i32
    %c0_i32_0 = arith.constant 0 : i32
    %c0_i32_1 = arith.constant 0 : i32
    return %c0_i32, %c0_i32_0 : i32, i32
  }
  func.func @transform_8(%arg0: i32) -> (i32, i32) {
    %c0_i32 = arith.constant 0 : i32
    %c0_i32_0 = arith.constant 0 : i32
    %c0_i32_1 = arith.constant 0 : i32
    return %c0_i32, %c0_i32_0 : i32, i32
  }
  func.func @transform_9(%arg0: i32) -> (i32, i32) {
    %c0_i32 = arith.constant 0 : i32
    %c0_i32_0 = arith.constant 0 : i32
    return %arg0, %c0_i32 : i32, i32
  }
}

</mosaic_0001>

<llo_original>
// kernel: tpu_custom_call.1
$region0: #{tpu_custom_call.1}
  #allocation0 [shape = 'u32[]', space=smem, size = 0x4, offset = 0x4, fixed_abs, tag = 'smem constant byte address 0x4 - core index']
  #allocation1 [shape = 'u32[72,128]{1,0:T(1,128)}', space=vmem, size = 0x9000, scoped, tag = 'internal scratch']
  #allocation2 [shape = 'f32[1,1]{1,0:T(1,128)S(1)}', space=vmem, size = 0x200, scoped, tag = 'scoped memory for tpu_custom_call.1']
  %s0 = inlined_call_operand.hbm [shape: f32[16,8,32], index: 0, kind: input, shape index: {}]
  %s1 = inlined_call_operand.vmem [shape: s32[16,1], index: 1, kind: input, shape index: {}]
  %s2 = inlined_call_operand.hbm [shape: f32[32,128], index: 2, kind: input, shape index: {}]
  %s3 = inlined_call_operand.hbm [shape: f32[32,128], index: 3, kind: input, shape index: {}]
  %s4 = inlined_call_operand.hbm [shape: f32[128,256], index: 4, kind: input, shape index: {}]
  %s5 = inlined_call_operand.hbm [shape: f32[32,256], index: 5, kind: input, shape index: {}]
  %s6 = inlined_call_operand.vmem [shape: f32[1,128], index: 6, kind: input, shape index: {}]
  %s7 = inlined_call_operand.vmem [shape: f32[1,128], index: 7, kind: input, shape index: {}]
  %s8 = inlined_call_operand.<no memory space> [shape: f32[1,1], index: 8, kind: input, shape index: {}]
  %s9 = inlined_call_operand.hbm [shape: f32[16,128], index: 9, kind: output, shape index: {}]
  %s10 = sld [smem:[#allocation0]]
  $region66: #{tpu_custom_call.1} parent=0
    _
  %s12 = ssub.s32 1, %s10
  %s13 = scalar_select 0, %s12, %s10
  %v14 = vstv %s8
  %15 = vst [vmem:[#allocation2] sm:$0x1] %v14
  $region1: #{tpu_custom_call.1} parent=0
    #allocation3 [shape = 'u8[65536]{0}', space=vmem, size = 0x10000, scoped, tag = 'input window, operand 0, single buffered']
    #allocation4 [shape = 's32[1]{0}', space=sflag, size = 0x4, scoped, tag = 'scoped memory for tpu_custom_call.1']
    #allocation5 [shape = 's32[1]{0}', space=sflag, size = 0x4, scoped, tag = 'scoped memory for tpu_custom_call.1']
    #allocation6 [shape = 'u8[16384]{0}', space=vmem, size = 0x4000, scoped, tag = 'input window, operand 2, single buffered']
    #allocation7 [shape = 's32[1]{0}', space=sflag, size = 0x4, scoped, tag = 'scoped memory for tpu_custom_call.1']
    #allocation8 [shape = 'u8[16384]{0}', space=vmem, size = 0x4000, scoped, tag = 'input window, operand 3, single buffered']
    #allocation9 [shape = 'u8[131072]{0}', space=vmem, size = 0x20000, scoped, tag = 'input window, operand 4, single buffered']
    #allocation10 [shape = 's32[1]{0}', space=sflag, size = 0x4, scoped, tag = 'scoped memory for tpu_custom_call.1']
    #allocation11 [shape = 'u8[32768]{0}', space=vmem, size = 0x8000, scoped, tag = 'input window, operand 5, single buffered']
    #allocation12 [shape = 'u8[8192]{0}', space=vmem, size = 0x2000, scoped, tag = 'output window, operand 0, single buffered']
    %16 = vsyncpa [#allocation4], 0
    %17 = vsyncpa [#allocation7], 0
    %18 = vsyncpa [#allocation10], 0
    %19 = vsyncpa [#allocation5], 0
    // Predicated region
    $region2: #{tpu_custom_call.1} parent=1 // pred_check
      _
    $region3: #{tpu_custom_call.1} parent=1 // pred_check_branch
      %21 = sbr.rel (0) target = $region5
    $region4: #{tpu_custom_call.1} parent=1 // pred_region
      %23 = vsyncadd [#allocation4], 0
      %s24 = sshll.u32 %s0, 4
      %s25 = int_to_ptr.hbm [resolvable:$true] %s24
      %s26 = sshll.u32 [#allocation3], 4
      %s27 = int_to_ptr.vmem [resolvable:$true] %s26
      %32 = dma.hbm_to_vmem [thread:$0]  %s25, 2048, %s27, [#allocation4], 128, 128, 8
    $region5: #{tpu_custom_call.1} parent=1 // pred_fallthru
      _
    // Predicated region
    $region6: #{tpu_custom_call.1} parent=1 // pred_check
      _
    $region7: #{tpu_custom_call.1} parent=1 // pred_check_branch
      %34 = sbr.rel (0) target = $region9
    $region8: #{tpu_custom_call.1} parent=1 // pred_region
      _
    $region9: #{tpu_custom_call.1} parent=1 // pred_fallthru
      _
    // Predicated region
    $region10: #{tpu_custom_call.1} parent=1 // pred_check
      _
    $region11: #{tpu_custom_call.1} parent=1 // pred_check_branch
      %36 = sbr.rel (0) target = $region13
    $region12: #{tpu_custom_call.1} parent=1 // pred_region
      %38 = vsyncadd [#allocation7], 0
      %s39 = sshll.u32 %s2, 4
      %s40 = int_to_ptr.hbm [resolvable:$true] %s39
      %s41 = sshll.u32 [#allocation6], 4
      %s42 = int_to_ptr.vmem [resolvable:$true] %s41
      %47 = dma.hbm_to_vmem [thread:$0]  %s40, 512, %s42, [#allocation7], 128, 128, 8
    $region13: #{tpu_custom_call.1} parent=1 // pred_fallthru
      _
    // Predicated region
    $region14: #{tpu_custom_call.1} parent=1 // pred_check
      _
    $region15: #{tpu_custom_call.1} parent=1 // pred_check_branch
      %49 = sbr.rel (0) target = $region17
    $region16: #{tpu_custom_call.1} parent=1 // pred_region
      %51 = vsyncadd [#allocation7], 0
      %s52 = sshll.u32 %s3, 4
      %s53 = int_to_ptr.hbm [resolvable:$true] %s52
      %s54 = sshll.u32 [#allocation8], 4
      %s55 = int_to_ptr.vmem [resolvable:$true] %s54
      %60 = dma.hbm_to_vmem [thread:$0]  %s53, 512, %s55, [#allocation7], 128, 128, 8
    $region17: #{tpu_custom_call.1} parent=1 // pred_fallthru
      _
    // Predicated region
    $region18: #{tpu_custom_call.1} parent=1 // pred_check
      _
    $region19: #{tpu_custom_call.1} parent=1 // pred_check_branch
      %62 = sbr.rel (0) target = $region21
    $region20: #{tpu_custom_call.1} parent=1 // pred_region
      %64 = vsyncadd [#allocation10], 0
      %s65 = sshll.u32 %s4, 4
      %s66 = int_to_ptr.hbm [resolvable:$true] %s65
      %s67 = sshll.u32 [#allocation9], 4
      %s68 = int_to_ptr.vmem [resolvable:$true] %s67
      %73 = dma.hbm_to_vmem [thread:$0]  %s66, 4096, %s68, [#allocation10], 256, 256, 16
    $region21: #{tpu_custom_call.1} parent=1 // pred_fallthru
      _
    // Predicated region
    $region22: #{tpu_custom_call.1} parent=1 // pred_check
      _
    $region23: #{tpu_custom_call.1} parent=1 // pred_check_branch
      %75 = sbr.rel (0) target = $region25
    $region24: #{tpu_custom_call.1} parent=1 // pred_region
      %77 = vsyncadd [#allocation10], 0
      %s78 = sshll.u32 %s5, 4
      %s79 = int_to_ptr.hbm [resolvable:$true] %s78
      %s80 = sshll.u32 [#allocation11], 4
      %s81 = int_to_ptr.vmem [resolvable:$true] %s80
      %86 = dma.hbm_to_vmem [thread:$0]  %s79, 1024, %s81, [#allocation10], 256, 256, 16
    $region25: #{tpu_custom_call.1} parent=1 // pred_fallthru
      _
    // Predicated region
    $region26: #{tpu_custom_call.1} parent=1 // pred_check
      _
    $region27: #{tpu_custom_call.1} parent=1 // pred_check_branch
      %88 = sbr.rel (0) target = $region29
    $region28: #{tpu_custom_call.1} parent=1 // pred_region
      _
    $region29: #{tpu_custom_call.1} parent=1 // pred_fallthru
      _
    // Predicated region
    $region30: #{tpu_custom_call.1} parent=1 // pred_check
      _
    $region31: #{tpu_custom_call.1} parent=1 // pred_check_branch
      %90 = sbr.rel (0) target = $region33
    $region32: #{tpu_custom_call.1} parent=1 // pred_region
      _
    $region33: #{tpu_custom_call.1} parent=1 // pred_fallthru
      _
    // Predicated region
    $region34: #{tpu_custom_call.1} parent=1 // pred_check
      _
    $region35: #{tpu_custom_call.1} parent=1 // pred_check_branch
      %92 = sbr.rel (0) target = $region37
    $region36: #{tpu_custom_call.1} parent=1 // pred_region
      _
    $region37: #{tpu_custom_call.1} parent=1 // pred_fallthru
      _
    // Predicated region
    $region38: #{tpu_custom_call.1} parent=1 // pred_check
      _
    $region39: #{tpu_custom_call.1} parent=1 // pred_check_branch
      %94 = sbr.rel (0) target = $region41
    $region40: #{tpu_custom_call.1} parent=1 // pred_region
      %96 = dma.done [#allocation4], 2048
    $region41: #{tpu_custom_call.1} parent=1 // pred_fallthru
      _
    // Predicated region
    $region42: #{tpu_custom_call.1} parent=1 // pred_check
      _
    $region43: #{tpu_custom_call.1} parent=1 // pred_check_branch
      %98 = sbr.rel (0) target = $region45
    $region44: #{tpu_custom_call.1} parent=1 // pred_region
      %100 = dma.done [#allocation7], 512
    $region45: #{tpu_custom_call.1} parent=1 // pred_fallthru
      _
    // Predicated region
    $region46: #{tpu_custom_call.1} parent=1 // pred_check
      _
    $region47: #{tpu_custom_call.1} parent=1 // pred_check_branch
      %102 = sbr.rel (0) target = $region49
    $region48: #{tpu_custom_call.1} parent=1 // pred_region
      %104 = dma.done [#allocation7], 512
    $region49: #{tpu_custom_call.1} parent=1 // pred_fallthru
      _
    // Predicated region
    $region50: #{tpu_custom_call.1} parent=1 // pred_check
      _
    $region51: #{tpu_custom_call.1} parent=1 // pred_check_branch
      %106 = sbr.rel (0) target = $region53
    $region52: #{tpu_custom_call.1} parent=1 // pred_region
      %108 = dma.done [#allocation10], 4096
    $region53: #{tpu_custom_call.1} parent=1 // pred_fallthru
      _
    // Predicated region
    $region54: #{tpu_custom_call.1} parent=1 // pred_check
      _
    $region55: #{tpu_custom_call.1} parent=1 // pred_check_branch
      %110 = sbr.rel (0) target = $region57
    $region56: #{tpu_custom_call.1} parent=1 // pred_region
      %112 = dma.done [#allocation10], 1024
    $region57: #{tpu_custom_call.1} parent=1 // pred_fallthru
      _
    %v113 = vld [vmem:[#allocation3] sm:$0xff]
    %v114 = vld [vmem:[#allocation3 + $0x8] sm:$0xff]
    %v115 = vld [vmem:[#allocation3 + $0x10] sm:$0xff]
    %v116 = vld [vmem:[#allocation3 + $0x18] sm:$0xff]
    %v117 = vld [vmem:[#allocation3 + $0x20] sm:$0xff]
    %v118 = vld [vmem:[#allocation3 + $0x28] sm:$0xff]
    %v119 = vld [vmem:[#allocation3 + $0x30] sm:$0xff]
    %v120 = vld [vmem:[#allocation3 + $0x38] sm:$0xff]
    %v121 = vld [vmem:[#allocation3 + $0x40] sm:$0xff]
    %v122 = vld [vmem:[#allocation3 + $0x48] sm:$0xff]
    %v123 = vld [vmem:[#allocation3 + $0x50] sm:$0xff]
    %v124 = vld [vmem:[#allocation3 + $0x58] sm:$0xff]
    %v125 = vld [vmem:[#allocation3 + $0x60] sm:$0xff]
    %v126 = vld [vmem:[#allocation3 + $0x68] sm:$0xff]
    %v127 = vld [vmem:[#allocation3 + $0x70] sm:$0xff]
    %v128 = vld [vmem:[#allocation3 + $0x78] sm:$0xff]
    %v129 = vld [vmem:[#allocation6] sm:$0xff]
    %v130 = vld [vmem:[#allocation6 + $0x8] sm:$0xff]
    %v131 = vld [vmem:[#allocation6 + $0x10] sm:$0xff]
    %v132 = vld [vmem:[#allocation6 + $0x18] sm:$0xff]
    %v133 = vld [vmem:[#allocation8] sm:$0xff]
    %v134 = vld [vmem:[#allocation8 + $0x8] sm:$0xff]
    %v135 = vld [vmem:[#allocation8 + $0x10] sm:$0xff]
    %v136 = vld [vmem:[#allocation8 + $0x18] sm:$0xff]
    %vm137 = vcmask 261120
    %v139 = vsel %vm137, %v113, 0
    %v142 = vsel %vm137, %v114, 0
    %v145 = vsel %vm137, %v115, 0
    %v148 = vsel %vm137, %v116, 0
    %v151 = vsel %vm137, %v117, 0
    %v154 = vsel %vm137, %v118, 0
    %v157 = vsel %vm137, %v119, 0
    %v160 = vsel %vm137, %v120, 0
    %v163 = vsel %vm137, %v121, 0
    %v166 = vsel %vm137, %v122, 0
    %v169 = vsel %vm137, %v123, 0
    %v172 = vsel %vm137, %v124, 0
    %v175 = vsel %vm137, %v125, 0
    %v178 = vsel %vm137, %v126, 0
    %v181 = vsel %vm137, %v127, 0
    %v184 = vsel %vm137, %v128, 0
    %186 = vmatpush.msra.mxu0 0.0
    %187 = vmatpush.msra.mxu0 0.0
    %188 = vmatpush.msra.mxu0 0.0
    %189 = vmatpush.msra.mxu0 0.0
    %190 = vmatpush.msra.mxu0 0.0
    %191 = vmatpush.msra.mxu0 0.0
    %192 = vmatpush.msra.mxu0 0.0
    %193 = vmatpush.msra.mxu0 0.0
    %194 = vmatpush.msra.mxu0 0.0
    %195 = vmatpush.msra.mxu0 0.0
    %196 = vmatpush.msra.mxu0 0.0
    %197 = vmatpush.msra.mxu0 0.0
    %198 = vmatpush.msra.mxu0 %v136
    %199 = vmatpush.msra.mxu0 %v135
    %200 = vmatpush.msra.mxu0 %v134
    %201 = vmatpush.msra.mxu0 %v133
    %202 = vmatmul.f32.gmra.mxu0 %v139
    %v203 = vpop.f32.mrf.mxu0
    %v204 = vadd.f32 0.0, %v203
    %205 = vmatmul.f32.gmra.mxu0 %v142
    %v206 = vpop.f32.mrf.mxu0
    %v207 = vadd.f32 0.0, %v206
    %208 = vmatmul.f32.gmra.mxu0 %v145
    %v209 = vpop.f32.mrf.mxu0
    %v210 = vadd.f32 0.0, %v209
    %211 = vmatmul.f32.gmra.mxu0 %v148
    %v212 = vpop.f32.mrf.mxu0
    %v213 = vadd.f32 0.0, %v212
    %214 = vmatmul.f32.gmra.mxu0 %v151
    %v215 = vpop.f32.mrf.mxu0
    %v216 = vadd.f32 0.0, %v215
    %217 = vmatmul.f32.gmra.mxu0 %v154
    %v218 = vpop.f32.mrf.mxu0
    %v219 = vadd.f32 0.0, %v218
    %220 = vmatmul.f32.gmra.mxu0 %v157
    %v221 = vpop.f32.mrf.mxu0
    %v222 = vadd.f32 0.0, %v221
    %223 = vmatmul.f32.gmra.mxu0 %v160
    %v224 = vpop.f32.mrf.mxu0
    %v225 = vadd.f32 0.0, %v224
    %226 = vmatmul.f32.gmra.mxu0 %v163
    %v227 = vpop.f32.mrf.mxu0
    %v228 = vadd.f32 0.0, %v227
    %229 = vmatmul.f32.gmra.mxu0 %v166
    %v230 = vpop.f32.mrf.mxu0
    %v231 = vadd.f32 0.0, %v230
    %232 = vmatmul.f32.gmra.mxu0 %v169
    %v233 = vpop.f32.mrf.mxu0
    %v234 = vadd.f32 0.0, %v233
    %235 = vmatmul.f32.gmra.mxu0 %v172
    %v236 = vpop.f32.mrf.mxu0
    %v237 = vadd.f32 0.0, %v236
    %238 = vmatmul.f32.gmra.mxu0 %v175
    %v239 = vpop.f32.mrf.mxu0
    %v240 = vadd.f32 0.0, %v239
    %241 = vmatmul.f32.gmra.mxu0 %v178
    %v242 = vpop.f32.mrf.mxu0
    %v243 = vadd.f32 0.0, %v242
    %244 = vmatmul.f32.gmra.mxu0 %v181
    %v245 = vpop.f32.mrf.mxu0
    %v246 = vadd.f32 0.0, %v245
    %247 = vmatmul.f32.gmra.mxu0 %v184
    %v248 = vpop.f32.mrf.mxu0
    %v249 = vadd.f32 0.0, %v248
    %250 = vdwg.mxu0
    %v251 = vlaneseq
    %v252 = vshrl.u32 %v251, 7
    %v253 = vadd.s32 %v252, 8
    %v254 = vadd.s32 %v252, 16
    %v255 = vadd.s32 %v252, 24
    %v256 = vadd.s32 %v252, 32
    %v257 = vadd.s32 %v252, 40
    %v258 = vadd.s32 %v252, 48
    %v259 = vadd.s32 %v252, 56
    %v260 = vadd.s32 %v252, 64
    %v261 = vadd.s32 %v252, 72
    %v262 = vadd.s32 %v252, 80
    %v263 = vadd.s32 %v252, 88
    %v264 = vadd.s32 %v252, 96
    %v265 = vadd.s32 %v252, 104
    %v266 = vadd.s32 %v252, 112
    %v267 = vadd.s32 %v252, 120
    %vm268 = vcmp.lt.s32.totalorder %v252, 0
    %v269 = vsub.s32 0, %v252
    %v270 = vsel %vm268, %v269, %v252
    %v271 = vshrl.u32 %v270, 3
    %v272 = vand.u32 %v270, 7
    %v273 = vsub.s32 0, %v272
    %v274 = vsel %vm268, %v273, %v272
    %vm275 = vcmp.lt.s32.totalorder %v253, 0
    %v276 = vsub.s32 0, %v253
    %v277 = vsel %vm275, %v276, %v253
    %v278 = vshrl.u32 %v277, 3
    %v279 = vand.u32 %v277, 7
    %v280 = vsub.s32 0, %v279
    %v281 = vsel %vm275, %v280, %v279
    %vm282 = vcmp.lt.s32.totalorder %v254, 0
    %v283 = vsub.s32 0, %v254
    %v284 = vsel %vm282, %v283, %v254
    %v285 = vshrl.u32 %v284, 3
    %v286 = vand.u32 %v284, 7
    %v287 = vsub.s32 0, %v286
    %v288 = vsel %vm282, %v287, %v286
    %vm289 = vcmp.lt.s32.totalorder %v255, 0
    %v290 = vsub.s32 0, %v255
    %v291 = vsel %vm289, %v290, %v255
    %v292 = vshrl.u32 %v291, 3
    %v293 = vand.u32 %v291, 7
    %v294 = vsub.s32 0, %v293
    %v295 = vsel %vm289, %v294, %v293
    %vm296 = vcmp.lt.s32.totalorder %v256, 0
    %v297 = vsub.s32 0, %v256
    %v298 = vsel %vm296, %v297, %v256
    %v299 = vshrl.u32 %v298, 3
    %v300 = vand.u32 %v298, 7
    %v301 = vsub.s32 0, %v300
    %v302 = vsel %vm296, %v301, %v300
    %vm303 = vcmp.lt.s32.totalorder %v257, 0
    %v304 = vsub.s32 0, %v257
    %v305 = vsel %vm303, %v304, %v257
    %v306 = vshrl.u32 %v305, 3
    %v307 = vand.u32 %v305, 7
    %v308 = vsub.s32 0, %v307
    %v309 = vsel %vm303, %v308, %v307
    %vm310 = vcmp.lt.s32.totalorder %v258, 0
    %v311 = vsub.s32 0, %v258
    %v312 = vsel %vm310, %v311, %v258
    %v313 = vshrl.u32 %v312, 3
    %v314 = vand.u32 %v312, 7
    %v315 = vsub.s32 0, %v314
    %v316 = vsel %vm310, %v315, %v314
    %vm317 = vcmp.lt.s32.totalorder %v259, 0
    %v318 = vsub.s32 0, %v259
    %v319 = vsel %vm317, %v318, %v259
    %v320 = vshrl.u32 %v319, 3
    %v321 = vand.u32 %v319, 7
    %v322 = vsub.s32 0, %v321
    %v323 = vsel %vm317, %v322, %v321
    %vm324 = vcmp.lt.s32.totalorder %v260, 0
    %v325 = vsub.s32 0, %v260
    %v326 = vsel %vm324, %v325, %v260
    %v327 = vshrl.u32 %v326, 3
    %v328 = vand.u32 %v326, 7
    %v329 = vsub.s32 0, %v328
    %v330 = vsel %vm324, %v329, %v328
    %vm331 = vcmp.lt.s32.totalorder %v261, 0
    %v332 = vsub.s32 0, %v261
    %v333 = vsel %vm331, %v332, %v261
    %v334 = vshrl.u32 %v333, 3
    %v335 = vand.u32 %v333, 7
    %v336 = vsub.s32 0, %v335
    %v337 = vsel %vm331, %v336, %v335
    %vm338 = vcmp.lt.s32.totalorder %v262, 0
    %v339 = vsub.s32 0, %v262
    %v340 = vsel %vm338, %v339, %v262
    %v341 = vshrl.u32 %v340, 3
    %v342 = vand.u32 %v340, 7
    %v343 = vsub.s32 0, %v342
    %v344 = vsel %vm338, %v343, %v342
    %vm345 = vcmp.lt.s32.totalorder %v263, 0
    %v346 = vsub.s32 0, %v263
    %v347 = vsel %vm345, %v346, %v263
    %v348 = vshrl.u32 %v347, 3
    %v349 = vand.u32 %v347, 7
    %v350 = vsub.s32 0, %v349
    %v351 = vsel %vm345, %v350, %v349
    %vm352 = vcmp.lt.s32.totalorder %v264, 0
    %v353 = vsub.s32 0, %v264
    %v354 = vsel %vm352, %v353, %v264
    %v355 = vshrl.u32 %v354, 3
    %v356 = vand.u32 %v354, 7
    %v357 = vsub.s32 0, %v356
    %v358 = vsel %vm352, %v357, %v356
    %vm359 = vcmp.lt.s32.totalorder %v265, 0
    %v360 = vsub.s32 0, %v265
    %v361 = vsel %vm359, %v360, %v265
    %v362 = vshrl.u32 %v361, 3
    %v363 = vand.u32 %v361, 7
    %v364 = vsub.s32 0, %v363
    %v365 = vsel %vm359, %v364, %v363
    %vm366 = vcmp.lt.s32.totalorder %v266, 0
    %v367 = vsub.s32 0, %v266
    %v368 = vsel %vm366, %v367, %v266
    %v369 = vshrl.u32 %v368, 3
    %v370 = vand.u32 %v368, 7
    %v371 = vsub.s32 0, %v370
    %v372 = vsel %vm366, %v371, %v370
    %vm373 = vcmp.lt.s32.totalorder %v267, 0
    %v374 = vsub.s32 0, %v267
    %v375 = vsel %vm373, %v374, %v267
    %v376 = vshrl.u32 %v375, 3
    %v377 = vand.u32 %v375, 7
    %v378 = vsub.s32 0, %v377
    %v379 = vsel %vm373, %v378, %v377
    %vm380 = vcmp.ne.s32.totalorder %v274, 0
    %vm381 = vcmp.ne.s32.totalorder %v281, 0
    %vm382 = vcmp.ne.s32.totalorder %v288, 0
    %vm383 = vcmp.ne.s32.totalorder %v295, 0
    %vm384 = vcmp.ne.s32.totalorder %v302, 0
    %vm385 = vcmp.ne.s32.totalorder %v309, 0
    %vm386 = vcmp.ne.s32.totalorder %v316, 0
    %vm387 = vcmp.ne.s32.totalorder %v323, 0
    %vm388 = vcmp.ne.s32.totalorder %v330, 0
    %vm389 = vcmp.ne.s32.totalorder %v337, 0
    %vm390 = vcmp.ne.s32.totalorder %v344, 0
    %vm391 = vcmp.ne.s32.totalorder %v351, 0
    %vm392 = vcmp.ne.s32.totalorder %v358, 0
    %vm393 = vcmp.ne.s32.totalorder %v365, 0
    %vm394 = vcmp.ne.s32.totalorder %v372, 0
    %vm395 = vcmp.ne.s32.totalorder %v379, 0
    %vm396 = vcmp.lt.s32.totalorder %v274, 0
    %vm397 = vcmp.lt.s32.totalorder %v281, 0
    %vm398 = vcmp.lt.s32.totalorder %v288, 0
    %vm399 = vcmp.lt.s32.totalorder %v295, 0
    %vm400 = vcmp.lt.s32.totalorder %v302, 0
    %vm401 = vcmp.lt.s32.totalorder %v309, 0
    %vm402 = vcmp.lt.s32.totalorder %v316, 0
    %vm403 = vcmp.lt.s32.totalorder %v323, 0
    %vm404 = vcmp.lt.s32.totalorder %v330, 0
    %vm405 = vcmp.lt.s32.totalorder %v337, 0
    %vm406 = vcmp.lt.s32.totalorder %v344, 0
    %vm407 = vcmp.lt.s32.totalorder %v351, 0
    %vm408 = vcmp.lt.s32.totalorder %v358, 0
    %vm409 = vcmp.lt.s32.totalorder %v365, 0
    %vm410 = vcmp.lt.s32.totalorder %v372, 0
    %vm411 = vcmp.lt.s32.totalorder %v379, 0
    %vm412 = vmand %vm396, %vm380
    %vm413 = vmand %vm397, %vm381
    %vm414 = vmand %vm398, %vm382
    %vm415 = vmand %vm399, %vm383
    %vm416 = vmand %vm400, %vm384
    %vm417 = vmand %vm401, %vm385
    %vm418 = vmand %vm402, %vm386
    %vm419 = vmand %vm403, %vm387
    %vm420 = vmand %vm404, %vm388
    %vm421 = vmand %vm405, %vm389
    %vm422 = vmand %vm406, %vm390
    %vm423 = vmand %vm407, %vm391
    %vm424 = vmand %vm408, %vm392
    %vm425 = vmand %vm409, %vm393
    %vm426 = vmand %vm410, %vm394
    %vm427 = vmand %vm411, %vm395
    %v428 = vadd.s32 %v274, 8
    %v429 = vadd.s32 %v281, 8
    %v430 = vadd.s32 %v288, 8
    %v431 = vadd.s32 %v295, 8
    %v432 = vadd.s32 %v302, 8
    %v433 = vadd.s32 %v309, 8
    %v434 = vadd.s32 %v316, 8
    %v435 = vadd.s32 %v323, 8
    %v436 = vadd.s32 %v330, 8
    %v437 = vadd.s32 %v337, 8
    %v438 = vadd.s32 %v344, 8
    %v439 = vadd.s32 %v351, 8
    %v440 = vadd.s32 %v358, 8
    %v441 = vadd.s32 %v365, 8
    %v442 = vadd.s32 %v372, 8
    %v443 = vadd.s32 %v379, 8
    %v444 = vsel %vm412, %v428, %v274
    %v445 = vsel %vm413, %v429, %v281
    %v446 = vsel %vm414, %v430, %v288
    %v447 = vsel %vm415, %v431, %v295
    %v448 = vsel %vm416, %v432, %v302
    %v449 = vsel %vm417, %v433, %v309
    %v450 = vsel %vm418, %v434, %v316
    %v451 = vsel %vm419, %v435, %v323
    %v452 = vsel %vm420, %v436, %v330
    %v453 = vsel %vm421, %v437, %v337
    %v454 = vsel %vm422, %v438, %v344
    %v455 = vsel %vm423, %v439, %v351
    %v456 = vsel %vm424, %v440, %v358
    %v457 = vsel %vm425, %v441, %v365
    %v458 = vsel %vm426, %v442, %v372
    %v459 = vsel %vm427, %v443, %v379
    %vm460 = vcmp.ne.s32.totalorder %v444, 0
    %vm461 = vcmp.ne.s32.totalorder %v445, 0
    %vm462 = vcmp.ne.s32.totalorder %v446, 0
    %vm463 = vcmp.ne.s32.totalorder %v447, 0
    %vm464 = vcmp.ne.s32.totalorder %v448, 0
    %vm465 = vcmp.ne.s32.totalorder %v449, 0
    %vm466 = vcmp.ne.s32.totalorder %v450, 0
    %vm467 = vcmp.ne.s32.totalorder %v451, 0
    %vm468 = vcmp.ne.s32.totalorder %v452, 0
    %vm469 = vcmp.ne.s32.totalorder %v453, 0
    %vm470 = vcmp.ne.s32.totalorder %v454, 0
    %vm471 = vcmp.ne.s32.totalorder %v455, 0
    %vm472 = vcmp.ne.s32.totalorder %v456, 0
    %vm473 = vcmp.ne.s32.totalorder %v457, 0
    %vm474 = vcmp.ne.s32.totalorder %v458, 0
    %vm475 = vcmp.ne.s32.totalorder %v459, 0
    %v476 = vrot.slane %v204, 7
    %v477 = vrot.slane %v207, 7
    %v478 = vrot.slane %v210, 7
    %v479 = vrot.slane %v213, 7
    %v480 = vrot.slane %v216, 7
    %v481 = vrot.slane %v219, 7
    %v482 = vrot.slane %v222, 7
    %v483 = vrot.slane %v225, 7
    %v484 = vrot.slane %v228, 7
    %v485 = vrot.slane %v231, 7
    %v486 = vrot.slane %v234, 7
    %v487 = vrot.slane %v237, 7
    %v488 = vrot.slane %v240, 7
    %v489 = vrot.slane %v243, 7
    %v490 = vrot.slane %v246, 7
    %v491 = vrot.slane %v249, 7
    %vm492 = vcmp.lt.s32.totalorder %v252, 1
    %v493 = vsel %vm492, %v490, %v491
    %v494 = vsel %vm492, %v489, %v490
    %v495 = vsel %vm492, %v488, %v489
    %v496 = vsel %vm492, %v487, %v488
    %v497 = vsel %vm492, %v486, %v487
    %v498 = vsel %vm492, %v485, %v486
    %v499 = vsel %vm492, %v484, %v485
    %v500 = vsel %vm492, %v483, %v484
    %v501 = vsel %vm492, %v482, %v483
    %v502 = vsel %vm492, %v481, %v482
    %v503 = vsel %vm492, %v480, %v481
    %v504 = vsel %vm492, %v479, %v480
    %v505 = vsel %vm492, %v478, %v479
    %v506 = vsel %vm492, %v477, %v478
    %v507 = vsel %vm492, %v476, %v477
    %v508 = vsel %vm492, %v491, %v476
    %v509 = vsel %vm460, 1, 0
    %v510 = vsel %vm461, 1, 0
    %v511 = vsel %vm462, 1, 0
    %v512 = vsel %vm463, 1, 0
    %v513 = vsel %vm464, 1, 0
    %v514 = vsel %vm465, 1, 0
    %v515 = vsel %vm466, 1, 0
    %v516 = vsel %vm467, 1, 0
    %v517 = vsel %vm468, 1, 0
    %v518 = vsel %vm469, 1, 0
    %v519 = vsel %vm470, 1, 0
    %v520 = vsel %vm471, 1, 0
    %v521 = vsel %vm472, 1, 0
    %v522 = vsel %vm473, 1, 0
    %v523 = vsel %vm474, 1, 0
    %v524 = vsel %vm475, 1, 0
    %vm525 = vcmp.eq.s32.totalorder %v509, 1
    %vm526 = vcmp.eq.s32.totalorder %v510, 1
    %vm527 = vcmp.eq.s32.totalorder %v511, 1
    %vm528 = vcmp.eq.s32.totalorder %v512, 1
    %vm529 = vcmp.eq.s32.totalorder %v513, 1
    %vm530 = vcmp.eq.s32.totalorder %v514, 1
    %vm531 = vcmp.eq.s32.totalorder %v515, 1
    %vm532 = vcmp.eq.s32.totalorder %v516, 1
    %vm533 = vcmp.eq.s32.totalorder %v517, 1
    %vm534 = vcmp.eq.s32.totalorder %v518, 1
    %vm535 = vcmp.eq.s32.totalorder %v519, 1
    %vm536 = vcmp.eq.s32.totalorder %v520, 1
    %vm537 = vcmp.eq.s32.totalorder %v521, 1
    %vm538 = vcmp.eq.s32.totalorder %v522, 1
    %vm539 = vcmp.eq.s32.totalorder %v523, 1
    %vm540 = vcmp.eq.s32.totalorder %v524, 1
    %v541 = vsel %vm525, %v508, 0.0
    %v542 = vsel %vm526, %v507, 0.0
    %v543 = vsel %vm527, %v506, 0.0
    %v544 = vsel %vm528, %v505, 0.0
    %v545 = vsel %vm529, %v504, 0.0
    %v546 = vsel %vm530, %v503, 0.0
    %v547 = vsel %vm531, %v502, 0.0
    %v548 = vsel %vm532, %v501, 0.0
    %v549 = vsel %vm533, %v500, 0.0
    %v550 = vsel %vm534, %v499, 0.0
    %v551 = vsel %vm535, %v498, 0.0
    %v552 = vsel %vm536, %v497, 0.0
    %v553 = vsel %vm537, %v496, 0.0
    %v554 = vsel %vm538, %v495, 0.0
    %v555 = vsel %vm539, %v494, 0.0
    %v556 = vsel %vm540, %v493, 0.0
    %557 = vmatpush.msra.mxu0 0.0
    %558 = vmatpush.msra.mxu0 0.0
    %559 = vmatpush.msra.mxu0 0.0
    %560 = vmatpush.msra.mxu0 0.0
    %561 = vmatpush.msra.mxu0 0.0
    %562 = vmatpush.msra.mxu0 0.0
    %563 = vmatpush.msra.mxu0 0.0
    %564 = vmatpush.msra.mxu0 0.0
    %565 = vmatpush.msra.mxu0 0.0
    %566 = vmatpush.msra.mxu0 0.0
    %567 = vmatpush.msra.mxu0 0.0
    %568 = vmatpush.msra.mxu0 0.0
    %569 = vmatpush.msra.mxu0 %v132
    %570 = vmatpush.msra.mxu0 %v131
    %571 = vmatpush.msra.mxu0 %v130
    %572 = vmatpush.msra.mxu0 %v129
    %573 = vmatmul.f32.gmra.mxu0 %v139
    %v574 = vpop.f32.mrf.mxu0
    %v575 = vadd.f32 %v541, %v574
    %576 = vmatmul.f32.gmra.mxu0 %v142
    %v577 = vpop.f32.mrf.mxu0
    %v578 = vadd.f32 %v542, %v577
    %579 = vmatmul.f32.gmra.mxu0 %v145
    %v580 = vpop.f32.mrf.mxu0
    %v581 = vadd.f32 %v543, %v580
    %582 = vmatmul.f32.gmra.mxu0 %v148
    %v583 = vpop.f32.mrf.mxu0
    %v584 = vadd.f32 %v544, %v583
    %585 = vmatmul.f32.gmra.mxu0 %v151
    %v586 = vpop.f32.mrf.mxu0
    %v587 = vadd.f32 %v545, %v586
    %588 = vmatmul.f32.gmra.mxu0 %v154
    %v589 = vpop.f32.mrf.mxu0
    %v590 = vadd.f32 %v546, %v589
    %591 = vmatmul.f32.gmra.mxu0 %v157
    %v592 = vpop.f32.mrf.mxu0
    %v593 = vadd.f32 %v547, %v592
    %594 = vmatmul.f32.gmra.mxu0 %v160
    %v595 = vpop.f32.mrf.mxu0
    %v596 = vadd.f32 %v548, %v595
    %597 = vmatmul.f32.gmra.mxu0 %v163
    %v598 = vpop.f32.mrf.mxu0
    %v599 = vadd.f32 %v549, %v598
    %600 = vmatmul.f32.gmra.mxu0 %v166
    %v601 = vpop.f32.mrf.mxu0
    %v602 = vadd.f32 %v550, %v601
    %603 = vmatmul.f32.gmra.mxu0 %v169
    %v604 = vpop.f32.mrf.mxu0
    %v605 = vadd.f32 %v551, %v604
    %606 = vmatmul.f32.gmra.mxu0 %v172
    %v607 = vpop.f32.mrf.mxu0
    %v608 = vadd.f32 %v552, %v607
    %609 = vmatmul.f32.gmra.mxu0 %v175
    %v610 = vpop.f32.mrf.mxu0
    %v611 = vadd.f32 %v553, %v610
    %612 = vmatmul.f32.gmra.mxu0 %v178
    %v613 = vpop.f32.mrf.mxu0
    %v614 = vadd.f32 %v554, %v613
    %615 = vmatmul.f32.gmra.mxu0 %v181
    %v616 = vpop.f32.mrf.mxu0
    %v617 = vadd.f32 %v555, %v616
    %618 = vmatmul.f32.gmra.mxu0 %v184
    %v619 = vpop.f32.mrf.mxu0
    %v620 = vadd.f32 %v556, %v619
    %621 = vdwg.mxu0
    %v622 = vld [vmem:[%s6] sm:$0x1]
    %v624 = vperm.slane %v622, 0
    %v626 = vadd.f32 %v575, %v624
    %v627 = vadd.f32 %v578, %v624
    %v628 = vadd.f32 %v581, %v624
    %v629 = vadd.f32 %v584, %v624
    %v630 = vadd.f32 %v587, %v624
    %v631 = vadd.f32 %v590, %v624
    %v632 = vadd.f32 %v593, %v624
    %v633 = vadd.f32 %v596, %v624
    %v634 = vadd.f32 %v599, %v624
    %v635 = vadd.f32 %v602, %v624
    %v636 = vadd.f32 %v605, %v624
    %v637 = vadd.f32 %v608, %v624
    %v638 = vadd.f32 %v611, %v624
    %v639 = vadd.f32 %v614, %v624
    %v640 = vadd.f32 %v617, %v624
    %v641 = vadd.f32 %v620, %v624
    %vm642 = vcmp.gt.f32.partialorder %v626, 0.0
    %vm643 = vcmp.gt.f32.partialorder %v627, 0.0
    %vm644 = vcmp.gt.f32.partialorder %v628, 0.0
    %vm645 = vcmp.gt.f32.partialorder %v629, 0.0
    %vm646 = vcmp.gt.f32.partialorder %v630, 0.0
    %vm647 = vcmp.gt.f32.partialorder %v631, 0.0
    %vm648 = vcmp.gt.f32.partialorder %v632, 0.0
    %vm649 = vcmp.gt.f32.partialorder %v633, 0.0
    %vm650 = vcmp.gt.f32.partialorder %v634, 0.0
    %vm651 = vcmp.gt.f32.partialorder %v635, 0.0
    %vm652 = vcmp.gt.f32.partialorder %v636, 0.0
    %vm653 = vcmp.gt.f32.partialorder %v637, 0.0
    %vm654 = vcmp.gt.f32.partialorder %v638, 0.0
    %vm655 = vcmp.gt.f32.partialorder %v639, 0.0
    %vm656 = vcmp.gt.f32.partialorder %v640, 0.0
    %vm657 = vcmp.gt.f32.partialorder %v641, 0.0
    %v658 = vmul.f32 %v626, 0.01
    %v659 = vmul.f32 %v627, 0.01
    %v660 = vmul.f32 %v628, 0.01
    %v661 = vmul.f32 %v629, 0.01
    %v662 = vmul.f32 %v630, 0.01
    %v663 = vmul.f32 %v631, 0.01
    %v664 = vmul.f32 %v632, 0.01
    %v665 = vmul.f32 %v633, 0.01
    %v666 = vmul.f32 %v634, 0.01
    %v667 = vmul.f32 %v635, 0.01
    %v668 = vmul.f32 %v636, 0.01
    %v669 = vmul.f32 %v637, 0.01
    %v670 = vmul.f32 %v638, 0.01
    %v671 = vmul.f32 %v639, 0.01
    %v672 = vmul.f32 %v640, 0.01
    %v673 = vmul.f32 %v641, 0.01
    %v674 = vsel %vm642, %v626, %v658
    %v675 = vsel %vm643, %v627, %v659
    %v676 = vsel %vm644, %v628, %v660
    %v677 = vsel %vm645, %v629, %v661
    %v678 = vsel %vm646, %v630, %v662
    %v679 = vsel %vm647, %v631, %v663
    %v680 = vsel %vm648, %v632, %v664
    %v681 = vsel %vm649, %v633, %v665
    %v682 = vsel %vm650, %v634, %v666
    %v683 = vsel %vm651, %v635, %v667
    %v684 = vsel %vm652, %v636, %v668
    %v685 = vsel %vm653, %v637, %v669
    %v686 = vsel %vm654, %v638, %v670
    %v687 = vsel %vm655, %v639, %v671
    %v688 = vsel %vm656, %v640, %v672
    %v689 = vsel %vm657, %v641, %v673
    %v690 = vld [vmem:[#allocation9] sm:$0xff]
    %v691 = vld [vmem:[#allocation9 + $0x8] sm:$0xff]
    %v692 = vld [vmem:[#allocation9 + $0x10] sm:$0xff]
    %v693 = vld [vmem:[#allocation9 + $0x18] sm:$0xff]
    %v694 = vld [vmem:[#allocation9 + $0x20] sm:$0xff]
    %v695 = vld [vmem:[#allocation9 + $0x28] sm:$0xff]
    %v696 = vld [vmem:[#allocation9 + $0x30] sm:$0xff]
    %v697 = vld [vmem:[#allocation9 + $0x38] sm:$0xff]
    %v698 = vld [vmem:[#allocation9 + $0x40] sm:$0xff]
    %v699 = vld [vmem:[#allocation9 + $0x48] sm:$0xff]
    %v700 = vld [vmem:[#allocation9 + $0x50] sm:$0xff]
    %v701 = vld [vmem:[#allocation9 + $0x58] sm:$0xff]
    %v702 = vld [vmem:[#allocation9 + $0x60] sm:$0xff]
    %v703 = vld [vmem:[#allocation9 + $0x68] sm:$0xff]
    %v704 = vld [vmem:[#allocation9 + $0x70] sm:$0xff]
    %v705 = vld [vmem:[#allocation9 + $0x78] sm:$0xff]
    %v706 = vld [vmem:[#allocation9 + $0x80] sm:$0xff]
    %v707 = vld [vmem:[#allocation9 + $0x88] sm:$0xff]
    %v708 = vld [vmem:[#allocation9 + $0x90] sm:$0xff]
    %v709 = vld [vmem:[#allocation9 + $0x98] sm:$0xff]
    %v710 = vld [vmem:[#allocation9 + $0xa0] sm:$0xff]
    %v711 = vld [vmem:[#allocation9 + $0xa8] sm:$0xff]
    %v712 = vld [vmem:[#allocation9 + $0xb0] sm:$0xff]
    %v713 = vld [vmem:[#allocation9 + $0xb8] sm:$0xff]
    %v714 = vld [vmem:[#allocation9 + $0xc0] sm:$0xff]
    %v715 = vld [vmem:[#allocation9 + $0xc8] sm:$0xff]
    %v716 = vld [vmem:[#allocation9 + $0xd0] sm:$0xff]
    %v717 = vld [vmem:[#allocation9 + $0xd8] sm:$0xff]
    %v718 = vld [vmem:[#allocation9 + $0xe0] sm:$0xff]
    %v719 = vld [vmem:[#allocation9 + $0xe8] sm:$0xff]
    %v720 = vld [vmem:[#allocation9 + $0xf0] sm:$0xff]
    %v721 = vld [vmem:[#allocation9 + $0xf8] sm:$0xff]
    %v722 = vld [vmem:[#allocation11] sm:$0xff]
    %v723 = vld [vmem:[#allocation11 + $0x8] sm:$0xff]
    %v724 = vld [vmem:[#allocation11 + $0x10] sm:$0xff]
    %v725 = vld [vmem:[#allocation11 + $0x18] sm:$0xff]
    %v726 = vld [vmem:[#allocation11 + $0x20] sm:$0xff]
    %v727 = vld [vmem:[#allocation11 + $0x28] sm:$0xff]
    %v728 = vld [vmem:[#allocation11 + $0x30] sm:$0xff]
    %v729 = vld [vmem:[#allocation11 + $0x38] sm:$0xff]
    %730 = vmatpush.msra.mxu0 0.0
    %731 = vmatpush.msra.mxu0 0.0
    %732 = vmatpush.msra.mxu0 0.0
    %733 = vmatpush.msra.mxu0 0.0
    %734 = vmatpush.msra.mxu0 0.0
    %735 = vmatpush.msra.mxu0 0.0
    %736 = vmatpush.msra.mxu0 0.0
    %737 = vmatpush.msra.mxu0 0.0
    %738 = vmatpush.msra.mxu0 0.0
    %739 = vmatpush.msra.mxu0 0.0
    %740 = vmatpush.msra.mxu0 0.0
    %741 = vmatpush.msra.mxu0 0.0
    %742 = vmatpush.msra.mxu0 %v728
    %743 = vmatpush.msra.mxu0 %v726
    %744 = vmatpush.msra.mxu0 %v724
    %745 = vmatpush.msra.mxu0 %v722
    %746 = vmatmul.f32.gmra.mxu0 %v139
    %v747 = vpop.f32.mrf.mxu0
    %v748 = vadd.f32 0.0, %v747
    %749 = vmatmul.f32.gmra.mxu0 %v142
    %v750 = vpop.f32.mrf.mxu0
    %v751 = vadd.f32 0.0, %v750
    %752 = vmatmul.f32.gmra.mxu0 %v145
    %v753 = vpop.f32.mrf.mxu0
    %v754 = vadd.f32 0.0, %v753
    %755 = vmatmul.f32.gmra.mxu0 %v148
    %v756 = vpop.f32.mrf.mxu0
    %v757 = vadd.f32 0.0, %v756
    %758 = vmatmul.f32.gmra.mxu0 %v151
    %v759 = vpop.f32.mrf.mxu0
    %v760 = vadd.f32 0.0, %v759
    %761 = vmatmul.f32.gmra.mxu0 %v154
    %v762 = vpop.f32.mrf.mxu0
    %v763 = vadd.f32 0.0, %v762
    %764 = vmatmul.f32.gmra.mxu0 %v157
    %v765 = vpop.f32.mrf.mxu0
    %v766 = vadd.f32 0.0, %v765
    %767 = vmatmul.f32.gmra.mxu0 %v160
    %v768 = vpop.f32.mrf.mxu0
    %v769 = vadd.f32 0.0, %v768
    %770 = vmatmul.f32.gmra.mxu0 %v163
    %v771 = vpop.f32.mrf.mxu0
    %v772 = vadd.f32 0.0, %v771
    %773 = vmatmul.f32.gmra.mxu0 %v166
    %v774 = vpop.f32.mrf.mxu0
    %v775 = vadd.f32 0.0, %v774
    %776 = vmatmul.f32.gmra.mxu0 %v169
    %v777 = vpop.f32.mrf.mxu0
    %v778 = vadd.f32 0.0, %v777
    %779 = vmatmul.f32.gmra.mxu0 %v172
    %v780 = vpop.f32.mrf.mxu0
    %v781 = vadd.f32 0.0, %v780
    %782 = vmatmul.f32.gmra.mxu0 %v175
    %v783 = vpop.f32.mrf.mxu0
    %v784 = vadd.f32 0.0, %v783
    %785 = vmatmul.f32.gmra.mxu0 %v178
    %v786 = vpop.f32.mrf.mxu0
    %v787 = vadd.f32 0.0, %v786
    %788 = vmatmul.f32.gmra.mxu0 %v181
    %v789 = vpop.f32.mrf.mxu0
    %v790 = vadd.f32 0.0, %v789
    %791 = vmatmul.f32.gmra.mxu0 %v184
    %v792 = vpop.f32.mrf.mxu0
    %v793 = vadd.f32 0.0, %v792
    %794 = vdwg.mxu0
    %795 = vmatpush.msra.mxu0 0.0
    %796 = vmatpush.msra.mxu0 0.0
    %797 = vmatpush.msra.mxu0 0.0
    %798 = vmatpush.msra.mxu0 0.0
    %799 = vmatpush.msra.mxu0 0.0
    %800 = vmatpush.msra.mxu0 0.0
    %801 = vmatpush.msra.mxu0 0.0
    %802 = vmatpush.msra.mxu0 0.0
    %803 = vmatpush.msra.mxu0 0.0
    %804 = vmatpush.msra.mxu0 0.0
    %805 = vmatpush.msra.mxu0 0.0
    %806 = vmatpush.msra.mxu0 0.0
    %807 = vmatpush.msra.mxu0 %v729
    %808 = vmatpush.msra.mxu0 %v727
    %809 = vmatpush.msra.mxu0 %v725
    %810 = vmatpush.msra.mxu0 %v723
    %811 = vmatmul.f32.gmra.mxu0 %v139
    %v812 = vpop.f32.mrf.mxu0
    %v813 = vadd.f32 0.0, %v812
    %814 = vmatmul.f32.gmra.mxu0 %v142
    %v815 = vpop.f32.mrf.mxu0
    %v816 = vadd.f32 0.0, %v815
    %817 = vmatmul.f32.gmra.mxu0 %v145
    %v818 = vpop.f32.mrf.mxu0
    %v819 = vadd.f32 0.0, %v818
    %820 = vmatmul.f32.gmra.mxu0 %v148
    %v821 = vpop.f32.mrf.mxu0
    %v822 = vadd.f32 0.0, %v821
    %823 = vmatmul.f32.gmra.mxu0 %v151
    %v824 = vpop.f32.mrf.mxu0
    %v825 = vadd.f32 0.0, %v824
    %826 = vmatmul.f32.gmra.mxu0 %v154
    %v827 = vpop.f32.mrf.mxu0
    %v828 = vadd.f32 0.0, %v827
    %829 = vmatmul.f32.gmra.mxu0 %v157
    %v830 = vpop.f32.mrf.mxu0
    %v831 = vadd.f32 0.0, %v830
    %832 = vmatmul.f32.gmra.mxu0 %v160
    %v833 = vpop.f32.mrf.mxu0
    %v834 = vadd.f32 0.0, %v833
    %835 = vmatmul.f32.gmra.mxu0 %v163
    %v836 = vpop.f32.mrf.mxu0
    %v837 = vadd.f32 0.0, %v836
    %838 = vmatmul.f32.gmra.mxu0 %v166
    %v839 = vpop.f32.mrf.mxu0
    %v840 = vadd.f32 0.0, %v839
    %841 = vmatmul.f32.gmra.mxu0 %v169
    %v842 = vpop.f32.mrf.mxu0
    %v843 = vadd.f32 0.0, %v842
    %844 = vmatmul.f32.gmra.mxu0 %v172
    %v845 = vpop.f32.mrf.mxu0
    %v846 = vadd.f32 0.0, %v845
    %847 = vmatmul.f32.gmra.mxu0 %v175
    %v848 = vpop.f32.mrf.mxu0
    %v849 = vadd.f32 0.0, %v848
    %850 = vmatmul.f32.gmra.mxu0 %v178
    %v851 = vpop.f32.mrf.mxu0
    %v852 = vadd.f32 0.0, %v851
    %853 = vmatmul.f32.gmra.mxu0 %v181
    %v854 = vpop.f32.mrf.mxu0
    %v855 = vadd.f32 0.0, %v854
    %856 = vmatmul.f32.gmra.mxu0 %v184
    %v857 = vpop.f32.mrf.mxu0
    %v858 = vadd.f32 0.0, %v857
    %859 = vdwg.mxu0
    %860 = vmatpush.msra.mxu0 %v720
    %861 = vmatpush.msra.mxu0 %v718
    %862 = vmatpush.msra.mxu0 %v716
    %863 = vmatpush.msra.mxu0 %v714
    %864 = vmatpush.msra.mxu0 %v712
    %865 = vmatpush.msra.mxu0 %v710
    %866 = vmatpush.msra.mxu0 %v708
    %867 = vmatpush.msra.mxu0 %v706
    %868 = vmatpush.msra.mxu0 %v704
    %869 = vmatpush.msra.mxu0 %v702
    %870 = vmatpush.msra.mxu0 %v700
    %871 = vmatpush.msra.mxu0 %v698
    %872 = vmatpush.msra.mxu0 %v696
    %873 = vmatpush.msra.mxu0 %v694
    %874 = vmatpush.msra.mxu0 %v692
    %875 = vmatpush.msra.mxu0 %v690
    %876 = vmatmul.f32.gmra.mxu0 %v674
    %v877 = vpop.f32.mrf.mxu0
    %v878 = vadd.f32 %v748, %v877
    %879 = vmatmul.f32.gmra.mxu0 %v675
    %v880 = vpop.f32.mrf.mxu0
    %v881 = vadd.f32 %v751, %v880
    %882 = vmatmul.f32.gmra.mxu0 %v676
    %v883 = vpop.f32.mrf.mxu0
    %v884 = vadd.f32 %v754, %v883
    %885 = vmatmul.f32.gmra.mxu0 %v677
    %v886 = vpop.f32.mrf.mxu0
    %v887 = vadd.f32 %v757, %v886
    %888 = vmatmul.f32.gmra.mxu0 %v678
    %v889 = vpop.f32.mrf.mxu0
    %v890 = vadd.f32 %v760, %v889
    %891 = vmatmul.f32.gmra.mxu0 %v679
    %v892 = vpop.f32.mrf.mxu0
    %v893 = vadd.f32 %v763, %v892
    %894 = vmatmul.f32.gmra.mxu0 %v680
    %v895 = vpop.f32.mrf.mxu0
    %v896 = vadd.f32 %v766, %v895
    %897 = vmatmul.f32.gmra.mxu0 %v681
    %v898 = vpop.f32.mrf.mxu0
    %v899 = vadd.f32 %v769, %v898
    %900 = vmatmul.f32.gmra.mxu0 %v682
    %v901 = vpop.f32.mrf.mxu0
    %v902 = vadd.f32 %v772, %v901
    %903 = vmatmul.f32.gmra.mxu0 %v683
    %v904 = vpop.f32.mrf.mxu0
    %v905 = vadd.f32 %v775, %v904
    %906 = vmatmul.f32.gmra.mxu0 %v684
    %v907 = vpop.f32.mrf.mxu0
    %v908 = vadd.f32 %v778, %v907
    %909 = vmatmul.f32.gmra.mxu0 %v685
    %v910 = vpop.f32.mrf.mxu0
    %v911 = vadd.f32 %v781, %v910
    %912 = vmatmul.f32.gmra.mxu0 %v686
    %v913 = vpop.f32.mrf.mxu0
    %v914 = vadd.f32 %v784, %v913
    %915 = vmatmul.f32.gmra.mxu0 %v687
    %v916 = vpop.f32.mrf.mxu0
    %v917 = vadd.f32 %v787, %v916
    %918 = vmatmul.f32.gmra.mxu0 %v688
    %v919 = vpop.f32.mrf.mxu0
    %v920 = vadd.f32 %v790, %v919
    %921 = vmatmul.f32.gmra.mxu0 %v689
    %v922 = vpop.f32.mrf.mxu0
    %v923 = vadd.f32 %v793, %v922
    %924 = vdwg.mxu0
    %925 = vmatpush.msra.mxu0 %v721
    %926 = vmatpush.msra.mxu0 %v719
    %927 = vmatpush.msra.mxu0 %v717
    %928 = vmatpush.msra.mxu0 %v715
    %929 = vmatpush.msra.mxu0 %v713
    %930 = vmatpush.msra.mxu0 %v711
    %931 = vmatpush.msra.mxu0 %v709
    %932 = vmatpush.msra.mxu0 %v707
    %933 = vmatpush.msra.mxu0 %v705
    %934 = vmatpush.msra.mxu0 %v703
    %935 = vmatpush.msra.mxu0 %v701
    %936 = vmatpush.msra.mxu0 %v699
    %937 = vmatpush.msra.mxu0 %v697
    %938 = vmatpush.msra.mxu0 %v695
    %939 = vmatpush.msra.mxu0 %v693
    %940 = vmatpush.msra.mxu0 %v691
    %941 = vmatmul.f32.gmra.mxu0 %v674
    %v942 = vpop.f32.mrf.mxu0
    %v943 = vadd.f32 %v813, %v942
    %944 = vmatmul.f32.gmra.mxu0 %v675
    %v945 = vpop.f32.mrf.mxu0
    %v946 = vadd.f32 %v816, %v945
    %947 = vmatmul.f32.gmra.mxu0 %v676
    %v948 = vpop.f32.mrf.mxu0
    %v949 = vadd.f32 %v819, %v948
    %950 = vmatmul.f32.gmra.mxu0 %v677
    %v951 = vpop.f32.mrf.mxu0
    %v952 = vadd.f32 %v822, %v951
    %953 = vmatmul.f32.gmra.mxu0 %v678
    %v954 = vpop.f32.mrf.mxu0
    %v955 = vadd.f32 %v825, %v954
    %956 = vmatmul.f32.gmra.mxu0 %v679
    %v957 = vpop.f32.mrf.mxu0
    %v958 = vadd.f32 %v828, %v957
    %959 = vmatmul.f32.gmra.mxu0 %v680
    %v960 = vpop.f32.mrf.mxu0
    %v961 = vadd.f32 %v831, %v960
    %962 = vmatmul.f32.gmra.mxu0 %v681
    %v963 = vpop.f32.mrf.mxu0
    %v964 = vadd.f32 %v834, %v963
    %965 = vmatmul.f32.gmra.mxu0 %v682
    %v966 = vpop.f32.mrf.mxu0
    %v967 = vadd.f32 %v837, %v966
    %968 = vmatmul.f32.gmra.mxu0 %v683
    %v969 = vpop.f32.mrf.mxu0
    %v970 = vadd.f32 %v840, %v969
    %971 = vmatmul.f32.gmra.mxu0 %v684
    %v972 = vpop.f32.mrf.mxu0
    %v973 = vadd.f32 %v843, %v972
    %974 = vmatmul.f32.gmra.mxu0 %v685
    %v975 = vpop.f32.mrf.mxu0
    %v976 = vadd.f32 %v846, %v975
    %977 = vmatmul.f32.gmra.mxu0 %v686
    %v978 = vpop.f32.mrf.mxu0
    %v979 = vadd.f32 %v849, %v978
    %980 = vmatmul.f32.gmra.mxu0 %v687
    %v981 = vpop.f32.mrf.mxu0
    %v982 = vadd.f32 %v852, %v981
    %983 = vmatmul.f32.gmra.mxu0 %v688
    %v984 = vpop.f32.mrf.mxu0
    %v985 = vadd.f32 %v855, %v984
    %986 = vmatmul.f32.gmra.mxu0 %v689
    %v987 = vpop.f32.mrf.mxu0
    %v988 = vadd.f32 %v858, %v987
    %989 = vdwg.mxu0
    %v990 = vld [vmem:[%s7] sm:$0x1]
    %v992 = vperm.slane %v990, 0
    %v994 = vadd.f32 %v878, %v992
    %v995 = vadd.f32 %v881, %v992
    %v996 = vadd.f32 %v884, %v992
    %v997 = vadd.f32 %v887, %v992
    %v998 = vadd.f32 %v890, %v992
    %v999 = vadd.f32 %v893, %v992
    %v1000 = vadd.f32 %v896, %v992
    %v1001 = vadd.f32 %v899, %v992
    %v1002 = vadd.f32 %v902, %v992
    %v1003 = vadd.f32 %v905, %v992
    %v1004 = vadd.f32 %v908, %v992
    %v1005 = vadd.f32 %v911, %v992
    %v1006 = vadd.f32 %v914, %v992
    %v1007 = vadd.f32 %v917, %v992
    %v1008 = vadd.f32 %v920, %v992
    %v1009 = vadd.f32 %v923, %v992
    %vm1010 = vcmp.gt.f32.partialorder %v994, 0.0
    %vm1011 = vcmp.gt.f32.partialorder %v995, 0.0
    %vm1012 = vcmp.gt.f32.partialorder %v996, 0.0
    %vm1013 = vcmp.gt.f32.partialorder %v997, 0.0
    %vm1014 = vcmp.gt.f32.partialorder %v998, 0.0
    %vm1015 = vcmp.gt.f32.partialorder %v999, 0.0
    %vm1016 = vcmp.gt.f32.partialorder %v1000, 0.0
    %vm1017 = vcmp.gt.f32.partialorder %v1001, 0.0
    %vm1018 = vcmp.gt.f32.partialorder %v1002, 0.0
    %vm1019 = vcmp.gt.f32.partialorder %v1003, 0.0
    %vm1020 = vcmp.gt.f32.partialorder %v1004, 0.0
    %vm1021 = vcmp.gt.f32.partialorder %v1005, 0.0
    %vm1022 = vcmp.gt.f32.partialorder %v1006, 0.0
    %vm1023 = vcmp.gt.f32.partialorder %v1007, 0.0
    %vm1024 = vcmp.gt.f32.partialorder %v1008, 0.0
    %vm1025 = vcmp.gt.f32.partialorder %v1009, 0.0
    %v1026 = vmul.f32 %v994, 0.01
    %v1027 = vmul.f32 %v995, 0.01
    %v1028 = vmul.f32 %v996, 0.01
    %v1029 = vmul.f32 %v997, 0.01
    %v1030 = vmul.f32 %v998, 0.01
    %v1031 = vmul.f32 %v999, 0.01
    %v1032 = vmul.f32 %v1000, 0.01
    %v1033 = vmul.f32 %v1001, 0.01
    %v1034 = vmul.f32 %v1002, 0.01
    %v1035 = vmul.f32 %v1003, 0.01
    %v1036 = vmul.f32 %v1004, 0.01
    %v1037 = vmul.f32 %v1005, 0.01
    %v1038 = vmul.f32 %v1006, 0.01
    %v1039 = vmul.f32 %v1007, 0.01
    %v1040 = vmul.f32 %v1008, 0.01
    %v1041 = vmul.f32 %v1009, 0.01
    %v1042 = vsel %vm1010, %v994, %v1026
    %v1043 = vsel %vm1011, %v995, %v1027
    %v1044 = vsel %vm1012, %v996, %v1028
    %v1045 = vsel %vm1013, %v997, %v1029
    %v1046 = vsel %vm1014, %v998, %v1030
    %v1047 = vsel %vm1015, %v999, %v1031
    %v1048 = vsel %vm1016, %v1000, %v1032
    %v1049 = vsel %vm1017, %v1001, %v1033
    %v1050 = vsel %vm1018, %v1002, %v1034
    %v1051 = vsel %vm1019, %v1003, %v1035
    %v1052 = vsel %vm1020, %v1004, %v1036
    %v1053 = vsel %vm1021, %v1005, %v1037
    %v1054 = vsel %vm1022, %v1006, %v1038
    %v1055 = vsel %vm1023, %v1007, %v1039
    %v1056 = vsel %vm1024, %v1008, %v1040
    %v1057 = vsel %vm1025, %v1009, %v1041
    %v1058 = vld [vmem:[#allocation2] sm:$0x1]
    %v1060 = vperm.slane %v1058, 0
    %v1062 = vadd.f32 %v943, %v1060
    %v1063 = vadd.f32 %v946, %v1060
    %v1064 = vadd.f32 %v949, %v1060
    %v1065 = vadd.f32 %v952, %v1060
    %v1066 = vadd.f32 %v955, %v1060
    %v1067 = vadd.f32 %v958, %v1060
    %v1068 = vadd.f32 %v961, %v1060
    %v1069 = vadd.f32 %v964, %v1060
    %v1070 = vadd.f32 %v967, %v1060
    %v1071 = vadd.f32 %v970, %v1060
    %v1072 = vadd.f32 %v973, %v1060
    %v1073 = vadd.f32 %v976, %v1060
    %v1074 = vadd.f32 %v979, %v1060
    %v1075 = vadd.f32 %v982, %v1060
    %v1076 = vadd.f32 %v985, %v1060
    %v1077 = vadd.f32 %v988, %v1060
    %v1078 = vld [vmem:[%s1] sm:$0xff]
    %v1079 = vld [vmem:[%s1 + $0x8] sm:$0xff]
    %v1080 = vrot.slane %v1078, 1
    %v1081 = vrot.slane %v1078, 2
    %v1082 = vrot.slane %v1078, 3
    %v1083 = vrot.slane %v1078, 4
    %v1084 = vrot.slane %v1078, 5
    %v1085 = vrot.slane %v1078, 6
    %v1086 = vrot.slane %v1078, 7
    %v1087 = vrot.slane %v1079, 1
    %v1088 = vrot.slane %v1079, 2
    %v1089 = vrot.slane %v1079, 3
    %v1090 = vrot.slane %v1079, 4
    %v1091 = vrot.slane %v1079, 5
    %v1092 = vrot.slane %v1079, 6
    %v1093 = vrot.slane %v1079, 7
    %v1094 = vperm.slane %v1078, 0
    %v1095 = vperm.slane %v1080, 0
    %v1096 = vperm.slane %v1081, 0
    %v1097 = vperm.slane %v1082, 0
    %v1098 = vperm.slane %v1083, 0
    %v1099 = vperm.slane %v1084, 0
    %v1100 = vperm.slane %v1085, 0
    %v1101 = vperm.slane %v1086, 0
    %v1102 = vperm.slane %v1079, 0
    %v1103 = vperm.slane %v1087, 0
    %v1104 = vperm.slane %v1088, 0
    %v1105 = vperm.slane %v1089, 0
    %v1106 = vperm.slane %v1090, 0
    %v1107 = vperm.slane %v1091, 0
    %v1108 = vperm.slane %v1092, 0
    %v1109 = vperm.slane %v1093, 0
    %vm1110 = vcmp.lt.s32.totalorder %v252, %v1094
    %vm1111 = vcmp.lt.s32.totalorder %v252, %v1095
    %vm1112 = vcmp.lt.s32.totalorder %v252, %v1096
    %vm1113 = vcmp.lt.s32.totalorder %v252, %v1097
    %vm1114 = vcmp.lt.s32.totalorder %v252, %v1098
    %vm1115 = vcmp.lt.s32.totalorder %v252, %v1099
    %vm1116 = vcmp.lt.s32.totalorder %v252, %v1100
    %vm1117 = vcmp.lt.s32.totalorder %v252, %v1101
    %vm1118 = vcmp.lt.s32.totalorder %v252, %v1102
    %vm1119 = vcmp.lt.s32.totalorder %v252, %v1103
    %vm1120 = vcmp.lt.s32.totalorder %v252, %v1104
    %vm1121 = vcmp.lt.s32.totalorder %v252, %v1105
    %vm1122 = vcmp.lt.s32.totalorder %v252, %v1106
    %vm1123 = vcmp.lt.s32.totalorder %v252, %v1107
    %vm1124 = vcmp.lt.s32.totalorder %v252, %v1108
    %vm1125 = vcmp.lt.s32.totalorder %v252, %v1109
    %v1126 = vsel %vm1110, %v1062, -1e+30
    %v1127 = vsel %vm1111, %v1063, -1e+30
    %v1128 = vsel %vm1112, %v1064, -1e+30
    %v1129 = vsel %vm1113, %v1065, -1e+30
    %v1130 = vsel %vm1114, %v1066, -1e+30
    %v1131 = vsel %vm1115, %v1067, -1e+30
    %v1132 = vsel %vm1116, %v1068, -1e+30
    %v1133 = vsel %vm1117, %v1069, -1e+30
    %v1134 = vsel %vm1118, %v1070, -1e+30
    %v1135 = vsel %vm1119, %v1071, -1e+30
    %v1136 = vsel %vm1120, %v1072, -1e+30
    %v1137 = vsel %vm1121, %v1073, -1e+30
    %v1138 = vsel %vm1122, %v1074, -1e+30
    %v1139 = vsel %vm1123, %v1075, -1e+30
    %v1140 = vsel %vm1124, %v1076, -1e+30
    %v1141 = vsel %vm1125, %v1077, -1e+30
    %vm1142 = vcmask 7168
    %v1143 = vsel %vm1142, %v1126, -inf
    %v1144 = vrot.slane %v1143, 4
    %v1145 = vmax.f32 %v1143, %v1144
    %v1146 = vrot.slane %v1145, 2
    %v1147 = vmax.f32 %v1145, %v1146
    %v1148 = vrot.slane %v1147, 1
    %v1149 = vmax.f32 %v1147, %v1148
    %v1150 = vsel %vm1142, %v1127, -inf
    %v1151 = vrot.slane %v1150, 4
    %v1152 = vmax.f32 %v1150, %v1151
    %v1153 = vrot.slane %v1152, 2
    %v1154 = vmax.f32 %v1152, %v1153
    %v1155 = vrot.slane %v1154, 1
    %v1156 = vmax.f32 %v1154, %v1155
    %v1157 = vsel %vm1142, %v1128, -inf
    %v1158 = vrot.slane %v1157, 4
    %v1159 = vmax.f32 %v1157, %v1158
    %v1160 = vrot.slane %v1159, 2
    %v1161 = vmax.f32 %v1159, %v1160
    %v1162 = vrot.slane %v1161, 1
    %v1163 = vmax.f32 %v1161, %v1162
    %v1164 = vsel %vm1142, %v1129, -inf
    %v1165 = vrot.slane %v1164, 4
    %v1166 = vmax.f32 %v1164, %v1165
    %v1167 = vrot.slane %v1166, 2
    %v1168 = vmax.f32 %v1166, %v1167
    %v1169 = vrot.slane %v1168, 1
    %v1170 = vmax.f32 %v1168, %v1169
    %v1171 = vsel %vm1142, %v1130, -inf
    %v1172 = vrot.slane %v1171, 4
    %v1173 = vmax.f32 %v1171, %v1172
    %v1174 = vrot.slane %v1173, 2
    %v1175 = vmax.f32 %v1173, %v1174
    %v1176 = vrot.slane %v1175, 1
    %v1177 = vmax.f32 %v1175, %v1176
    %v1178 = vsel %vm1142, %v1131, -inf
    %v1179 = vrot.slane %v1178, 4
    %v1180 = vmax.f32 %v1178, %v1179
    %v1181 = vrot.slane %v1180, 2
    %v1182 = vmax.f32 %v1180, %v1181
    %v1183 = vrot.slane %v1182, 1
    %v1184 = vmax.f32 %v1182, %v1183
    %v1185 = vsel %vm1142, %v1132, -inf
    %v1186 = vrot.slane %v1185, 4
    %v1187 = vmax.f32 %v1185, %v1186
    %v1188 = vrot.slane %v1187, 2
    %v1189 = vmax.f32 %v1187, %v1188
    %v1190 = vrot.slane %v1189, 1
    %v1191 = vmax.f32 %v1189, %v1190
    %v1192 = vsel %vm1142, %v1133, -inf
    %v1193 = vrot.slane %v1192, 4
    %v1194 = vmax.f32 %v1192, %v1193
    %v1195 = vrot.slane %v1194, 2
    %v1196 = vmax.f32 %v1194, %v1195
    %v1197 = vrot.slane %v1196, 1
    %v1198 = vmax.f32 %v1196, %v1197
    %v1199 = vsel %vm1142, %v1134, -inf
    %v1200 = vrot.slane %v1199, 4
    %v1201 = vmax.f32 %v1199, %v1200
    %v1202 = vrot.slane %v1201, 2
    %v1203 = vmax.f32 %v1201, %v1202
    %v1204 = vrot.slane %v1203, 1
    %v1205 = vmax.f32 %v1203, %v1204
    %v1206 = vsel %vm1142, %v1135, -inf
    %v1207 = vrot.slane %v1206, 4
    %v1208 = vmax.f32 %v1206, %v1207
    %v1209 = vrot.slane %v1208, 2
    %v1210 = vmax.f32 %v1208, %v1209
    %v1211 = vrot.slane %v1210, 1
    %v1212 = vmax.f32 %v1210, %v1211
    %v1213 = vsel %vm1142, %v1136, -inf
    %v1214 = vrot.slane %v1213, 4
    %v1215 = vmax.f32 %v1213, %v1214
    %v1216 = vrot.slane %v1215, 2
    %v1217 = vmax.f32 %v1215, %v1216
    %v1218 = vrot.slane %v1217, 1
    %v1219 = vmax.f32 %v1217, %v1218
    %v1220 = vsel %vm1142, %v1137, -inf
    %v1221 = vrot.slane %v1220, 4
    %v1222 = vmax.f32 %v1220, %v1221
    %v1223 = vrot.slane %v1222, 2
    %v1224 = vmax.f32 %v1222, %v1223
    %v1225 = vrot.slane %v1224, 1
    %v1226 = vmax.f32 %v1224, %v1225
    %v1227 = vsel %vm1142, %v1138, -inf
    %v1228 = vrot.slane %v1227, 4
    %v1229 = vmax.f32 %v1227, %v1228
    %v1230 = vrot.slane %v1229, 2
    %v1231 = vmax.f32 %v1229, %v1230
    %v1232 = vrot.slane %v1231, 1
    %v1233 = vmax.f32 %v1231, %v1232
    %v1234 = vsel %vm1142, %v1139, -inf
    %v1235 = vrot.slane %v1234, 4
    %v1236 = vmax.f32 %v1234, %v1235
    %v1237 = vrot.slane %v1236, 2
    %v1238 = vmax.f32 %v1236, %v1237
    %v1239 = vrot.slane %v1238, 1
    %v1240 = vmax.f32 %v1238, %v1239
    %v1241 = vsel %vm1142, %v1140, -inf
    %v1242 = vrot.slane %v1241, 4
    %v1243 = vmax.f32 %v1241, %v1242
    %v1244 = vrot.slane %v1243, 2
    %v1245 = vmax.f32 %v1243, %v1244
    %v1246 = vrot.slane %v1245, 1
    %v1247 = vmax.f32 %v1245, %v1246
    %v1248 = vsel %vm1142, %v1141, -inf
    %v1249 = vrot.slane %v1248, 4
    %v1250 = vmax.f32 %v1248, %v1249
    %v1251 = vrot.slane %v1250, 2
    %v1252 = vmax.f32 %v1250, %v1251
    %v1253 = vrot.slane %v1252, 1
    %v1254 = vmax.f32 %v1252, %v1253
    %v1255 = vmax.f32 %v1149, 0.0
    %v1256 = vmax.f32 %v1156, 0.0
    %v1257 = vmax.f32 %v1163, 0.0
    %v1258 = vmax.f32 %v1170, 0.0
    %v1259 = vmax.f32 %v1177, 0.0
    %v1260 = vmax.f32 %v1184, 0.0
    %v1261 = vmax.f32 %v1191, 0.0
    %v1262 = vmax.f32 %v1198, 0.0
    %v1263 = vmax.f32 %v1205, 0.0
    %v1264 = vmax.f32 %v1212, 0.0
    %v1265 = vmax.f32 %v1219, 0.0
    %v1266 = vmax.f32 %v1226, 0.0
    %v1267 = vmax.f32 %v1233, 0.0
    %v1268 = vmax.f32 %v1240, 0.0
    %v1269 = vmax.f32 %v1247, 0.0
    %v1270 = vmax.f32 %v1254, 0.0
    %v1271 = vsub.f32 %v1126, %v1255
    %v1272 = vsub.f32 %v1127, %v1256
    %v1273 = vsub.f32 %v1128, %v1257
    %v1274 = vsub.f32 %v1129, %v1258
    %v1275 = vsub.f32 %v1130, %v1259
    %v1276 = vsub.f32 %v1131, %v1260
    %v1277 = vsub.f32 %v1132, %v1261
    %v1278 = vsub.f32 %v1133, %v1262
    %v1279 = vsub.f32 %v1134, %v1263
    %v1280 = vsub.f32 %v1135, %v1264
    %v1281 = vsub.f32 %v1136, %v1265
    %v1282 = vsub.f32 %v1137, %v1266
    %v1283 = vsub.f32 %v1138, %v1267
    %v1284 = vsub.f32 %v1139, %v1268
    %v1285 = vsub.f32 %v1140, %v1269
    %v1286 = vsub.f32 %v1141, %v1270
    %v1287 = vmul.f32 %v1271, 1.442695
    %v1288 = vpow.pop %v1287
    %v1289 = vmul.f32 %v1272, 1.442695
    %v1290 = vpow.pop %v1289
    %v1291 = vmul.f32 %v1273, 1.442695
    %v1292 = vpow.pop %v1291
    %v1293 = vmul.f32 %v1274, 1.442695
    %v1294 = vpow.pop %v1293
    %v1295 = vmul.f32 %v1275, 1.442695
    %v1296 = vpow.pop %v1295
    %v1297 = vmul.f32 %v1276, 1.442695
    %v1298 = vpow.pop %v1297
    %v1299 = vmul.f32 %v1277, 1.442695
    %v1300 = vpow.pop %v1299
    %v1301 = vmul.f32 %v1278, 1.442695
    %v1302 = vpow.pop %v1301
    %v1303 = vmul.f32 %v1279, 1.442695
    %v1304 = vpow.pop %v1303
    %v1305 = vmul.f32 %v1280, 1.442695
    %v1306 = vpow.pop %v1305
    %v1307 = vmul.f32 %v1281, 1.442695
    %v1308 = vpow.pop %v1307
    %v1309 = vmul.f32 %v1282, 1.442695
    %v1310 = vpow.pop %v1309
    %v1311 = vmul.f32 %v1283, 1.442695
    %v1312 = vpow.pop %v1311
    %v1313 = vmul.f32 %v1284, 1.442695
    %v1314 = vpow.pop %v1313
    %v1315 = vmul.f32 %v1285, 1.442695
    %v1316 = vpow.pop %v1315
    %v1317 = vmul.f32 %v1286, 1.442695
    %v1318 = vpow.pop %v1317
    %v1319 = vsel %vm1110, %v1288, 0.0
    %v1320 = vsel %vm1111, %v1290, 0.0
    %v1321 = vsel %vm1112, %v1292, 0.0
    %v1322 = vsel %vm1113, %v1294, 0.0
    %v1323 = vsel %vm1114, %v1296, 0.0
    %v1324 = vsel %vm1115, %v1298, 0.0
    %v1325 = vsel %vm1116, %v1300, 0.0
    %v1326 = vsel %vm1117, %v1302, 0.0
    %v1327 = vsel %vm1118, %v1304, 0.0
    %v1328 = vsel %vm1119, %v1306, 0.0
    %v1329 = vsel %vm1120, %v1308, 0.0
    %v1330 = vsel %vm1121, %v1310, 0.0
    %v1331 = vsel %vm1122, %v1312, 0.0
    %v1332 = vsel %vm1123, %v1314, 0.0
    %v1333 = vsel %vm1124, %v1316, 0.0
    %v1334 = vsel %vm1125, %v1318, 0.0
    %v1335 = vsel %vm1142, %v1319, 0.0
    %v1336 = vrot.slane %v1335, 4
    %v1337 = vadd.f32 %v1335, %v1336
    %v1338 = vrot.slane %v1337, 2
    %v1339 = vadd.f32 %v1337, %v1338
    %v1340 = vrot.slane %v1339, 1
    %v1341 = vadd.f32 %v1339, %v1340
    %v1342 = vsel %vm1142, %v1320, 0.0
    %v1343 = vrot.slane %v1342, 4
    %v1344 = vadd.f32 %v1342, %v1343
    %v1345 = vrot.slane %v1344, 2
    %v1346 = vadd.f32 %v1344, %v1345
    %v1347 = vrot.slane %v1346, 1
    %v1348 = vadd.f32 %v1346, %v1347
    %v1349 = vsel %vm1142, %v1321, 0.0
    %v1350 = vrot.slane %v1349, 4
    %v1351 = vadd.f32 %v1349, %v1350
    %v1352 = vrot.slane %v1351, 2
    %v1353 = vadd.f32 %v1351, %v1352
    %v1354 = vrot.slane %v1353, 1
    %v1355 = vadd.f32 %v1353, %v1354
    %v1356 = vsel %vm1142, %v1322, 0.0
    %v1357 = vrot.slane %v1356, 4
    %v1358 = vadd.f32 %v1356, %v1357
    %v1359 = vrot.slane %v1358, 2
    %v1360 = vadd.f32 %v1358, %v1359
    %v1361 = vrot.slane %v1360, 1
    %v1362 = vadd.f32 %v1360, %v1361
    %v1363 = vsel %vm1142, %v1323, 0.0
    %v1364 = vrot.slane %v1363, 4
    %v1365 = vadd.f32 %v1363, %v1364
    %v1366 = vrot.slane %v1365, 2
    %v1367 = vadd.f32 %v1365, %v1366
    %v1368 = vrot.slane %v1367, 1
    %v1369 = vadd.f32 %v1367, %v1368
    %v1370 = vsel %vm1142, %v1324, 0.0
    %v1371 = vrot.slane %v1370, 4
    %v1372 = vadd.f32 %v1370, %v1371
    %v1373 = vrot.slane %v1372, 2
    %v1374 = vadd.f32 %v1372, %v1373
    %v1375 = vrot.slane %v1374, 1
    %v1376 = vadd.f32 %v1374, %v1375
    %v1377 = vsel %vm1142, %v1325, 0.0
    %v1378 = vrot.slane %v1377, 4
    %v1379 = vadd.f32 %v1377, %v1378
    %v1380 = vrot.slane %v1379, 2
    %v1381 = vadd.f32 %v1379, %v1380
    %v1382 = vrot.slane %v1381, 1
    %v1383 = vadd.f32 %v1381, %v1382
    %v1384 = vsel %vm1142, %v1326, 0.0
    %v1385 = vrot.slane %v1384, 4
    %v1386 = vadd.f32 %v1384, %v1385
    %v1387 = vrot.slane %v1386, 2
    %v1388 = vadd.f32 %v1386, %v1387
    %v1389 = vrot.slane %v1388, 1
    %v1390 = vadd.f32 %v1388, %v1389
    %v1391 = vsel %vm1142, %v1327, 0.0
    %v1392 = vrot.slane %v1391, 4
    %v1393 = vadd.f32 %v1391, %v1392
    %v1394 = vrot.slane %v1393, 2
    %v1395 = vadd.f32 %v1393, %v1394
    %v1396 = vrot.slane %v1395, 1
    %v1397 = vadd.f32 %v1395, %v1396
    %v1398 = vsel %vm1142, %v1328, 0.0
    %v1399 = vrot.slane %v1398, 4
    %v1400 = vadd.f32 %v1398, %v1399
    %v1401 = vrot.slane %v1400, 2
    %v1402 = vadd.f32 %v1400, %v1401
    %v1403 = vrot.slane %v1402, 1
    %v1404 = vadd.f32 %v1402, %v1403
    %v1405 = vsel %vm1142, %v1329, 0.0
    %v1406 = vrot.slane %v1405, 4
    %v1407 = vadd.f32 %v1405, %v1406
    %v1408 = vrot.slane %v1407, 2
    %v1409 = vadd.f32 %v1407, %v1408
    %v1410 = vrot.slane %v1409, 1
    %v1411 = vadd.f32 %v1409, %v1410
    %v1412 = vsel %vm1142, %v1330, 0.0
    %v1413 = vrot.slane %v1412, 4
    %v1414 = vadd.f32 %v1412, %v1413
    %v1415 = vrot.slane %v1414, 2
    %v1416 = vadd.f32 %v1414, %v1415
    %v1417 = vrot.slane %v1416, 1
    %v1418 = vadd.f32 %v1416, %v1417
    %v1419 = vsel %vm1142, %v1331, 0.0
    %v1420 = vrot.slane %v1419, 4
    %v1421 = vadd.f32 %v1419, %v1420
    %v1422 = vrot.slane %v1421, 2
    %v1423 = vadd.f32 %v1421, %v1422
    %v1424 = vrot.slane %v1423, 1
    %v1425 = vadd.f32 %v1423, %v1424
    %v1426 = vsel %vm1142, %v1332, 0.0
    %v1427 = vrot.slane %v1426, 4
    %v1428 = vadd.f32 %v1426, %v1427
    %v1429 = vrot.slane %v1428, 2
    %v1430 = vadd.f32 %v1428, %v1429
    %v1431 = vrot.slane %v1430, 1
    %v1432 = vadd.f32 %v1430, %v1431
    %v1433 = vsel %vm1142, %v1333, 0.0
    %v1434 = vrot.slane %v1433, 4
    %v1435 = vadd.f32 %v1433, %v1434
    %v1436 = vrot.slane %v1435, 2
    %v1437 = vadd.f32 %v1435, %v1436
    %v1438 = vrot.slane %v1437, 1
    %v1439 = vadd.f32 %v1437, %v1438
    %v1440 = vsel %vm1142, %v1334, 0.0
    %v1441 = vrot.slane %v1440, 4
    %v1442 = vadd.f32 %v1440, %v1441
    %v1443 = vrot.slane %v1442, 2
    %v1444 = vadd.f32 %v1442, %v1443
    %v1445 = vrot.slane %v1444, 1
    %v1446 = vadd.f32 %v1444, %v1445
    %v1447 = vsub.f32 0.0, %v1255
    %v1448 = vsub.f32 0.0, %v1256
    %v1449 = vsub.f32 0.0, %v1257
    %v1450 = vsub.f32 0.0, %v1258
    %v1451 = vsub.f32 0.0, %v1259
    %v1452 = vsub.f32 0.0, %v1260
    %v1453 = vsub.f32 0.0, %v1261
    %v1454 = vsub.f32 0.0, %v1262
    %v1455 = vsub.f32 0.0, %v1263
    %v1456 = vsub.f32 0.0, %v1264
    %v1457 = vsub.f32 0.0, %v1265
    %v1458 = vsub.f32 0.0, %v1266
    %v1459 = vsub.f32 0.0, %v1267
    %v1460 = vsub.f32 0.0, %v1268
    %v1461 = vsub.f32 0.0, %v1269
    %v1462 = vsub.f32 0.0, %v1270
    %v1463 = vmul.f32 %v1447, 1.442695
    %v1464 = vpow.pop %v1463
    %v1465 = vmul.f32 %v1448, 1.442695
    %v1466 = vpow.pop %v1465
    %v1467 = vmul.f32 %v1449, 1.442695
    %v1468 = vpow.pop %v1467
    %v1469 = vmul.f32 %v1450, 1.442695
    %v1470 = vpow.pop %v1469
    %v1471 = vmul.f32 %v1451, 1.442695
    %v1472 = vpow.pop %v1471
    %v1473 = vmul.f32 %v1452, 1.442695
    %v1474 = vpow.pop %v1473
    %v1475 = vmul.f32 %v1453, 1.442695
    %v1476 = vpow.pop %v1475
    %v1477 = vmul.f32 %v1454, 1.442695
    %v1478 = vpow.pop %v1477
    %v1479 = vmul.f32 %v1455, 1.442695
    %v1480 = vpow.pop %v1479
    %v1481 = vmul.f32 %v1456, 1.442695
    %v1482 = vpow.pop %v1481
    %v1483 = vmul.f32 %v1457, 1.442695
    %v1484 = vpow.pop %v1483
    %v1485 = vmul.f32 %v1458, 1.442695
    %v1486 = vpow.pop %v1485
    %v1487 = vmul.f32 %v1459, 1.442695
    %v1488 = vpow.pop %v1487
    %v1489 = vmul.f32 %v1460, 1.442695
    %v1490 = vpow.pop %v1489
    %v1491 = vmul.f32 %v1461, 1.442695
    %v1492 = vpow.pop %v1491
    %v1493 = vmul.f32 %v1462, 1.442695
    %v1494 = vpow.pop %v1493
    %v1495 = vadd.f32 %v1341, %v1464
    %v1496 = vadd.f32 %v1348, %v1466
    %v1497 = vadd.f32 %v1355, %v1468
    %v1498 = vadd.f32 %v1362, %v1470
    %v1499 = vadd.f32 %v1369, %v1472
    %v1500 = vadd.f32 %v1376, %v1474
    %v1501 = vadd.f32 %v1383, %v1476
    %v1502 = vadd.f32 %v1390, %v1478
    %v1503 = vadd.f32 %v1397, %v1480
    %v1504 = vadd.f32 %v1404, %v1482
    %v1505 = vadd.f32 %v1411, %v1484
    %v1506 = vadd.f32 %v1418, %v1486
    %v1507 = vadd.f32 %v1425, %v1488
    %v1508 = vadd.f32 %v1432, %v1490
    %v1509 = vadd.f32 %v1439, %v1492
    %v1510 = vadd.f32 %v1446, %v1494
    %v1511 = vrcp.pop %v1495
    %v1512 = vmul.f32 %v1495, %v1511
    %v1513 = vsub.f32 1.0, %v1512
    %v1514 = vmul.f32 %v1511, %v1513
    %v1515 = vadd.f32 %v1511, %v1514
    %vm1516 = vweird.f32 %v1495
    %vm1517 = vweird.f32 %v1511
    %vm1518 = vmor %vm1516, %vm1517
    %v1519 = vsel %vm1518, %v1511, %v1515
    %v1520 = vand.u32 2147483647, %v1495
    %vm1521 = vcmp.eq.f32.partialorder %v1520, 8.507059e+37
    %v1522 = vand.u32 %v1495, 2147483648
    %v1523 = vor.u32 1.1754944e-38, %v1522
    %v1524 = vsel %vm1521, %v1523, %v1519
    %v1525 = vmul.f32 1.0, %v1524
    %v1526 = vrcp.pop %v1496
    %v1527 = vmul.f32 %v1496, %v1526
    %v1528 = vsub.f32 1.0, %v1527
    %v1529 = vmul.f32 %v1526, %v1528
    %v1530 = vadd.f32 %v1526, %v1529
    %vm1531 = vweird.f32 %v1496
    %vm1532 = vweird.f32 %v1526
    %vm1533 = vmor %vm1531, %vm1532
    %v1534 = vsel %vm1533, %v1526, %v1530
    %v1535 = vand.u32 2147483647, %v1496
    %vm1536 = vcmp.eq.f32.partialorder %v1535, 8.507059e+37
    %v1537 = vand.u32 %v1496, 2147483648
    %v1538 = vor.u32 1.1754944e-38, %v1537
    %v1539 = vsel %vm1536, %v1538, %v1534
    %v1540 = vmul.f32 1.0, %v1539
    %v1541 = vrcp.pop %v1497
    %v1542 = vmul.f32 %v1497, %v1541
    %v1543 = vsub.f32 1.0, %v1542
    %v1544 = vmul.f32 %v1541, %v1543
    %v1545 = vadd.f32 %v1541, %v1544
    %vm1546 = vweird.f32 %v1497
    %vm1547 = vweird.f32 %v1541
    %vm1548 = vmor %vm1546, %vm1547
    %v1549 = vsel %vm1548, %v1541, %v1545
    %v1550 = vand.u32 2147483647, %v1497
    %vm1551 = vcmp.eq.f32.partialorder %v1550, 8.507059e+37
    %v1552 = vand.u32 %v1497, 2147483648
    %v1553 = vor.u32 1.1754944e-38, %v1552
    %v1554 = vsel %vm1551, %v1553, %v1549
    %v1555 = vmul.f32 1.0, %v1554
    %v1556 = vrcp.pop %v1498
    %v1557 = vmul.f32 %v1498, %v1556
    %v1558 = vsub.f32 1.0, %v1557
    %v1559 = vmul.f32 %v1556, %v1558
    %v1560 = vadd.f32 %v1556, %v1559
    %vm1561 = vweird.f32 %v1498
    %vm1562 = vweird.f32 %v1556
    %vm1563 = vmor %vm1561, %vm1562
    %v1564 = vsel %vm1563, %v1556, %v1560
    %v1565 = vand.u32 2147483647, %v1498
    %vm1566 = vcmp.eq.f32.partialorder %v1565, 8.507059e+37
    %v1567 = vand.u32 %v1498, 2147483648
    %v1568 = vor.u32 1.1754944e-38, %v1567
    %v1569 = vsel %vm1566, %v1568, %v1564
    %v1570 = vmul.f32 1.0, %v1569
    %v1571 = vrcp.pop %v1499
    %v1572 = vmul.f32 %v1499, %v1571
    %v1573 = vsub.f32 1.0, %v1572
    %v1574 = vmul.f32 %v1571, %v1573
    %v1575 = vadd.f32 %v1571, %v1574
    %vm1576 = vweird.f32 %v1499
    %vm1577 = vweird.f32 %v1571
    %vm1578 = vmor %vm1576, %vm1577
    %v1579 = vsel %vm1578, %v1571, %v1575
    %v1580 = vand.u32 2147483647, %v1499
    %vm1581 = vcmp.eq.f32.partialorder %v1580, 8.507059e+37
    %v1582 = vand.u32 %v1499, 2147483648
    %v1583 = vor.u32 1.1754944e-38, %v1582
    %v1584 = vsel %vm1581, %v1583, %v1579
    %v1585 = vmul.f32 1.0, %v1584
    %v1586 = vrcp.pop %v1500
    %v1587 = vmul.f32 %v1500, %v1586
    %v1588 = vsub.f32 1.0, %v1587
    %v1589 = vmul.f32 %v1586, %v1588
    %v1590 = vadd.f32 %v1586, %v1589
    %vm1591 = vweird.f32 %v1500
    %vm1592 = vweird.f32 %v1586
    %vm1593 = vmor %vm1591, %vm1592
    %v1594 = vsel %vm1593, %v1586, %v1590
    %v1595 = vand.u32 2147483647, %v1500
    %vm1596 = vcmp.eq.f32.partialorder %v1595, 8.507059e+37
    %v1597 = vand.u32 %v1500, 2147483648
    %v1598 = vor.u32 1.1754944e-38, %v1597
    %v1599 = vsel %vm1596, %v1598, %v1594
    %v1600 = vmul.f32 1.0, %v1599
    %v1601 = vrcp.pop %v1501
    %v1602 = vmul.f32 %v1501, %v1601
    %v1603 = vsub.f32 1.0, %v1602
    %v1604 = vmul.f32 %v1601, %v1603
    %v1605 = vadd.f32 %v1601, %v1604
    %vm1606 = vweird.f32 %v1501
    %vm1607 = vweird.f32 %v1601
    %vm1608 = vmor %vm1606, %vm1607
    %v1609 = vsel %vm1608, %v1601, %v1605
    %v1610 = vand.u32 2147483647, %v1501
    %vm1611 = vcmp.eq.f32.partialorder %v1610, 8.507059e+37
    %v1612 = vand.u32 %v1501, 2147483648
    %v1613 = vor.u32 1.1754944e-38, %v1612
    %v1614 = vsel %vm1611, %v1613, %v1609
    %v1615 = vmul.f32 1.0, %v1614
    %v1616 = vrcp.pop %v1502
    %v1617 = vmul.f32 %v1502, %v1616
    %v1618 = vsub.f32 1.0, %v1617
    %v1619 = vmul.f32 %v1616, %v1618
    %v1620 = vadd.f32 %v1616, %v1619
    %vm1621 = vweird.f32 %v1502
    %vm1622 = vweird.f32 %v1616
    %vm1623 = vmor %vm1621, %vm1622
    %v1624 = vsel %vm1623, %v1616, %v1620
    %v1625 = vand.u32 2147483647, %v1502
    %vm1626 = vcmp.eq.f32.partialorder %v1625, 8.507059e+37
    %v1627 = vand.u32 %v1502, 2147483648
    %v1628 = vor.u32 1.1754944e-38, %v1627
    %v1629 = vsel %vm1626, %v1628, %v1624
    %v1630 = vmul.f32 1.0, %v1629
    %v1631 = vrcp.pop %v1503
    %v1632 = vmul.f32 %v1503, %v1631
    %v1633 = vsub.f32 1.0, %v1632
    %v1634 = vmul.f32 %v1631, %v1633
    %v1635 = vadd.f32 %v1631, %v1634
    %vm1636 = vweird.f32 %v1503
    %vm1637 = vweird.f32 %v1631
    %vm1638 = vmor %vm1636, %vm1637
    %v1639 = vsel %vm1638, %v1631, %v1635
    %v1640 = vand.u32 2147483647, %v1503
    %vm1641 = vcmp.eq.f32.partialorder %v1640, 8.507059e+37
    %v1642 = vand.u32 %v1503, 2147483648
    %v1643 = vor.u32 1.1754944e-38, %v1642
    %v1644 = vsel %vm1641, %v1643, %v1639
    %v1645 = vmul.f32 1.0, %v1644
    %v1646 = vrcp.pop %v1504
    %v1647 = vmul.f32 %v1504, %v1646
    %v1648 = vsub.f32 1.0, %v1647
    %v1649 = vmul.f32 %v1646, %v1648
    %v1650 = vadd.f32 %v1646, %v1649
    %vm1651 = vweird.f32 %v1504
    %vm1652 = vweird.f32 %v1646
    %vm1653 = vmor %vm1651, %vm1652
    %v1654 = vsel %vm1653, %v1646, %v1650
    %v1655 = vand.u32 2147483647, %v1504
    %vm1656 = vcmp.eq.f32.partialorder %v1655, 8.507059e+37
    %v1657 = vand.u32 %v1504, 2147483648
    %v1658 = vor.u32 1.1754944e-38, %v1657
    %v1659 = vsel %vm1656, %v1658, %v1654
    %v1660 = vmul.f32 1.0, %v1659
    %v1661 = vrcp.pop %v1505
    %v1662 = vmul.f32 %v1505, %v1661
    %v1663 = vsub.f32 1.0, %v1662
    %v1664 = vmul.f32 %v1661, %v1663
    %v1665 = vadd.f32 %v1661, %v1664
    %vm1666 = vweird.f32 %v1505
    %vm1667 = vweird.f32 %v1661
    %vm1668 = vmor %vm1666, %vm1667
    %v1669 = vsel %vm1668, %v1661, %v1665
    %v1670 = vand.u32 2147483647, %v1505
    %vm1671 = vcmp.eq.f32.partialorder %v1670, 8.507059e+37
    %v1672 = vand.u32 %v1505, 2147483648
    %v1673 = vor.u32 1.1754944e-38, %v1672
    %v1674 = vsel %vm1671, %v1673, %v1669
    %v1675 = vmul.f32 1.0, %v1674
    %v1676 = vrcp.pop %v1506
    %v1677 = vmul.f32 %v1506, %v1676
    %v1678 = vsub.f32 1.0, %v1677
    %v1679 = vmul.f32 %v1676, %v1678
    %v1680 = vadd.f32 %v1676, %v1679
    %vm1681 = vweird.f32 %v1506
    %vm1682 = vweird.f32 %v1676
    %vm1683 = vmor %vm1681, %vm1682
    %v1684 = vsel %vm1683, %v1676, %v1680
    %v1685 = vand.u32 2147483647, %v1506
    %vm1686 = vcmp.eq.f32.partialorder %v1685, 8.507059e+37
    %v1687 = vand.u32 %v1506, 2147483648
    %v1688 = vor.u32 1.1754944e-38, %v1687
    %v1689 = vsel %vm1686, %v1688, %v1684
    %v1690 = vmul.f32 1.0, %v1689
    %v1691 = vrcp.pop %v1507
    %v1692 = vmul.f32 %v1507, %v1691
    %v1693 = vsub.f32 1.0, %v1692
    %v1694 = vmul.f32 %v1691, %v1693
    %v1695 = vadd.f32 %v1691, %v1694
    %vm1696 = vweird.f32 %v1507
    %vm1697 = vweird.f32 %v1691
    %vm1698 = vmor %vm1696, %vm1697
    %v1699 = vsel %vm1698, %v1691, %v1695
    %v1700 = vand.u32 2147483647, %v1507
    %vm1701 = vcmp.eq.f32.partialorder %v1700, 8.507059e+37
    %v1702 = vand.u32 %v1507, 2147483648
    %v1703 = vor.u32 1.1754944e-38, %v1702
    %v1704 = vsel %vm1701, %v1703, %v1699
    %v1705 = vmul.f32 1.0, %v1704
    %v1706 = vrcp.pop %v1508
    %v1707 = vmul.f32 %v1508, %v1706
    %v1708 = vsub.f32 1.0, %v1707
    %v1709 = vmul.f32 %v1706, %v1708
    %v1710 = vadd.f32 %v1706, %v1709
    %vm1711 = vweird.f32 %v1508
    %vm1712 = vweird.f32 %v1706
    %vm1713 = vmor %vm1711, %vm1712
    %v1714 = vsel %vm1713, %v1706, %v1710
    %v1715 = vand.u32 2147483647, %v1508
    %vm1716 = vcmp.eq.f32.partialorder %v1715, 8.507059e+37
    %v1717 = vand.u32 %v1508, 2147483648
    %v1718 = vor.u32 1.1754944e-38, %v1717
    %v1719 = vsel %vm1716, %v1718, %v1714
    %v1720 = vmul.f32 1.0, %v1719
    %v1721 = vrcp.pop %v1509
    %v1722 = vmul.f32 %v1509, %v1721
    %v1723 = vsub.f32 1.0, %v1722
    %v1724 = vmul.f32 %v1721, %v1723
    %v1725 = vadd.f32 %v1721, %v1724
    %vm1726 = vweird.f32 %v1509
    %vm1727 = vweird.f32 %v1721
    %vm1728 = vmor %vm1726, %vm1727
    %v1729 = vsel %vm1728, %v1721, %v1725
    %v1730 = vand.u32 2147483647, %v1509
    %vm1731 = vcmp.eq.f32.partialorder %v1730, 8.507059e+37
    %v1732 = vand.u32 %v1509, 2147483648
    %v1733 = vor.u32 1.1754944e-38, %v1732
    %v1734 = vsel %vm1731, %v1733, %v1729
    %v1735 = vmul.f32 1.0, %v1734
    %v1736 = vrcp.pop %v1510
    %v1737 = vmul.f32 %v1510, %v1736
    %v1738 = vsub.f32 1.0, %v1737
    %v1739 = vmul.f32 %v1736, %v1738
    %v1740 = vadd.f32 %v1736, %v1739
    %vm1741 = vweird.f32 %v1510
    %vm1742 = vweird.f32 %v1736
    %vm1743 = vmor %vm1741, %vm1742
    %v1744 = vsel %vm1743, %v1736, %v1740
    %v1745 = vand.u32 2147483647, %v1510
    %vm1746 = vcmp.eq.f32.partialorder %v1745, 8.507059e+37
    %v1747 = vand.u32 %v1510, 2147483648
    %v1748 = vor.u32 1.1754944e-38, %v1747
    %v1749 = vsel %vm1746, %v1748, %v1744
    %v1750 = vmul.f32 1.0, %v1749
    %v1751 = vmul.f32 %v1319, %v1525
    %v1752 = vmul.f32 %v1320, %v1540
    %v1753 = vmul.f32 %v1321, %v1555
    %v1754 = vmul.f32 %v1322, %v1570
    %v1755 = vmul.f32 %v1323, %v1585
    %v1756 = vmul.f32 %v1324, %v1600
    %v1757 = vmul.f32 %v1325, %v1615
    %v1758 = vmul.f32 %v1326, %v1630
    %v1759 = vmul.f32 %v1327, %v1645
    %v1760 = vmul.f32 %v1328, %v1660
    %v1761 = vmul.f32 %v1329, %v1675
    %v1762 = vmul.f32 %v1330, %v1690
    %v1763 = vmul.f32 %v1331, %v1705
    %v1764 = vmul.f32 %v1332, %v1720
    %v1765 = vmul.f32 %v1333, %v1735
    %v1766 = vmul.f32 %v1334, %v1750
    %1768 = vset.pattern.permute.xlu0 0
    %1769 = vperm.xlu0 %1768, %v1751
    %v1770 = vpop.permute.xlu0 %1769
    %1773 = vset.pattern.permute.xlu0 0
    %1774 = vperm.xlu0 %1773, %v1752
    %v1775 = vpop.permute.xlu0 %1774
    %1778 = vset.pattern.permute.xlu0 0
    %1779 = vperm.xlu0 %1778, %v1753
    %v1780 = vpop.permute.xlu0 %1779
    %1783 = vset.pattern.permute.xlu0 0
    %1784 = vperm.xlu0 %1783, %v1754
    %v1785 = vpop.permute.xlu0 %1784
    %1788 = vset.pattern.permute.xlu0 0
    %1789 = vperm.xlu0 %1788, %v1755
    %v1790 = vpop.permute.xlu0 %1789
    %1793 = vset.pattern.permute.xlu0 0
    %1794 = vperm.xlu0 %1793, %v1756
    %v1795 = vpop.permute.xlu0 %1794
    %1798 = vset.pattern.permute.xlu0 0
    %1799 = vperm.xlu0 %1798, %v1757
    %v1800 = vpop.permute.xlu0 %1799
    %1803 = vset.pattern.permute.xlu0 0
    %1804 = vperm.xlu0 %1803, %v1758
    %v1805 = vpop.permute.xlu0 %1804
    %1808 = vset.pattern.permute.xlu0 0
    %1809 = vperm.xlu0 %1808, %v1759
    %v1810 = vpop.permute.xlu0 %1809
    %1813 = vset.pattern.permute.xlu0 0
    %1814 = vperm.xlu0 %1813, %v1760
    %v1815 = vpop.permute.xlu0 %1814
    %1818 = vset.pattern.permute.xlu0 0
    %1819 = vperm.xlu0 %1818, %v1761
    %v1820 = vpop.permute.xlu0 %1819
    %1823 = vset.pattern.permute.xlu0 0
    %1824 = vperm.xlu0 %1823, %v1762
    %v1825 = vpop.permute.xlu0 %1824
    %1828 = vset.pattern.permute.xlu0 0
    %1829 = vperm.xlu0 %1828, %v1763
    %v1830 = vpop.permute.xlu0 %1829
    %1833 = vset.pattern.permute.xlu0 0
    %1834 = vperm.xlu0 %1833, %v1764
    %v1835 = vpop.permute.xlu0 %1834
    %1838 = vset.pattern.permute.xlu0 0
    %1839 = vperm.xlu0 %1838, %v1765
    %v1840 = vpop.permute.xlu0 %1839
    %1843 = vset.pattern.permute.xlu0 0
    %1844 = vperm.xlu0 %1843, %v1766
    %v1845 = vpop.permute.xlu0 %1844
    %v1847 = vmul.f32 %v1042, %v1770
    %v1848 = vmul.f32 %v1043, %v1775
    %v1849 = vmul.f32 %v1044, %v1780
    %v1850 = vmul.f32 %v1045, %v1785
    %v1851 = vmul.f32 %v1046, %v1790
    %v1852 = vmul.f32 %v1047, %v1795
    %v1853 = vmul.f32 %v1048, %v1800
    %v1854 = vmul.f32 %v1049, %v1805
    %v1855 = vmul.f32 %v1050, %v1810
    %v1856 = vmul.f32 %v1051, %v1815
    %v1857 = vmul.f32 %v1052, %v1820
    %v1858 = vmul.f32 %v1053, %v1825
    %v1859 = vmul.f32 %v1054, %v1830
    %v1860 = vmul.f32 %v1055, %v1835
    %v1861 = vmul.f32 %v1056, %v1840
    %v1862 = vmul.f32 %v1057, %v1845
    %v1863 = vrot.slane %v1847, 4
    %v1864 = vadd.f32 %v1847, %v1863
    %v1865 = vrot.slane %v1864, 2
    %v1866 = vadd.f32 %v1864, %v1865
    %v1867 = vrot.slane %v1866, 1
    %v1868 = vadd.f32 %v1866, %v1867
    %v1869 = vrot.slane %v1848, 4
    %v1870 = vadd.f32 %v1848, %v1869
    %v1871 = vrot.slane %v1870, 2
    %v1872 = vadd.f32 %v1870, %v1871
    %v1873 = vrot.slane %v1872, 1
    %v1874 = vadd.f32 %v1872, %v1873
    %v1875 = vrot.slane %v1849, 4
    %v1876 = vadd.f32 %v1849, %v1875
    %v1877 = vrot.slane %v1876, 2
    %v1878 = vadd.f32 %v1876, %v1877
    %v1879 = vrot.slane %v1878, 1
    %v1880 = vadd.f32 %v1878, %v1879
    %v1881 = vrot.slane %v1850, 4
    %v1882 = vadd.f32 %v1850, %v1881
    %v1883 = vrot.slane %v1882, 2
    %v1884 = vadd.f32 %v1882, %v1883
    %v1885 = vrot.slane %v1884, 1
    %v1886 = vadd.f32 %v1884, %v1885
    %v1887 = vrot.slane %v1851, 4
    %v1888 = vadd.f32 %v1851, %v1887
    %v1889 = vrot.slane %v1888, 2
    %v1890 = vadd.f32 %v1888, %v1889
    %v1891 = vrot.slane %v1890, 1
    %v1892 = vadd.f32 %v1890, %v1891
    %v1893 = vrot.slane %v1852, 4
    %v1894 = vadd.f32 %v1852, %v1893
    %v1895 = vrot.slane %v1894, 2
    %v1896 = vadd.f32 %v1894, %v1895
    %v1897 = vrot.slane %v1896, 1
    %v1898 = vadd.f32 %v1896, %v1897
    %v1899 = vrot.slane %v1853, 4
    %v1900 = vadd.f32 %v1853, %v1899
    %v1901 = vrot.slane %v1900, 2
    %v1902 = vadd.f32 %v1900, %v1901
    %v1903 = vrot.slane %v1902, 1
    %v1904 = vadd.f32 %v1902, %v1903
    %v1905 = vrot.slane %v1854, 4
    %v1906 = vadd.f32 %v1854, %v1905
    %v1907 = vrot.slane %v1906, 2
    %v1908 = vadd.f32 %v1906, %v1907
    %v1909 = vrot.slane %v1908, 1
    %v1910 = vadd.f32 %v1908, %v1909
    %v1911 = vrot.slane %v1855, 4
    %v1912 = vadd.f32 %v1855, %v1911
    %v1913 = vrot.slane %v1912, 2
    %v1914 = vadd.f32 %v1912, %v1913
    %v1915 = vrot.slane %v1914, 1
    %v1916 = vadd.f32 %v1914, %v1915
    %v1917 = vrot.slane %v1856, 4
    %v1918 = vadd.f32 %v1856, %v1917
    %v1919 = vrot.slane %v1918, 2
    %v1920 = vadd.f32 %v1918, %v1919
    %v1921 = vrot.slane %v1920, 1
    %v1922 = vadd.f32 %v1920, %v1921
    %v1923 = vrot.slane %v1857, 4
    %v1924 = vadd.f32 %v1857, %v1923
    %v1925 = vrot.slane %v1924, 2
    %v1926 = vadd.f32 %v1924, %v1925
    %v1927 = vrot.slane %v1926, 1
    %v1928 = vadd.f32 %v1926, %v1927
    %v1929 = vrot.slane %v1858, 4
    %v1930 = vadd.f32 %v1858, %v1929
    %v1931 = vrot.slane %v1930, 2
    %v1932 = vadd.f32 %v1930, %v1931
    %v1933 = vrot.slane %v1932, 1
    %v1934 = vadd.f32 %v1932, %v1933
    %v1935 = vrot.slane %v1859, 4
    %v1936 = vadd.f32 %v1859, %v1935
    %v1937 = vrot.slane %v1936, 2
    %v1938 = vadd.f32 %v1936, %v1937
    %v1939 = vrot.slane %v1938, 1
    %v1940 = vadd.f32 %v1938, %v1939
    %v1941 = vrot.slane %v1860, 4
    %v1942 = vadd.f32 %v1860, %v1941
    %v1943 = vrot.slane %v1942, 2
    %v1944 = vadd.f32 %v1942, %v1943
    %v1945 = vrot.slane %v1944, 1
    %v1946 = vadd.f32 %v1944, %v1945
    %v1947 = vrot.slane %v1861, 4
    %v1948 = vadd.f32 %v1861, %v1947
    %v1949 = vrot.slane %v1948, 2
    %v1950 = vadd.f32 %v1948, %v1949
    %v1951 = vrot.slane %v1950, 1
    %v1952 = vadd.f32 %v1950, %v1951
    %v1953 = vrot.slane %v1862, 4
    %v1954 = vadd.f32 %v1862, %v1953
    %v1955 = vrot.slane %v1954, 2
    %v1956 = vadd.f32 %v1954, %v1955
    %v1957 = vrot.slane %v1956, 1
    %v1958 = vadd.f32 %v1956, %v1957
    %vm1975 = vcmask 1041409
    %v1976 = vsel %vm1975, %v1874, %v1868
    %vm1977 = vcmask 1042434
    %v1978 = vsel %vm1977, %v1880, %v1976
    %vm1979 = vcmask 1043459
    %v1980 = vsel %vm1979, %v1886, %v1978
    %vm1981 = vcmask 1044484
    %v1982 = vsel %vm1981, %v1892, %v1980
    %vm1983 = vcmask 1045509
    %v1984 = vsel %vm1983, %v1898, %v1982
    %vm1985 = vcmask 1046534
    %v1986 = vsel %vm1985, %v1904, %v1984
    %vm1987 = vcmask 1047559
    %v1988 = vsel %vm1987, %v1910, %v1986
    %v1989 = vsel %vm1975, %v1922, %v1916
    %v1990 = vsel %vm1977, %v1928, %v1989
    %v1991 = vsel %vm1979, %v1934, %v1990
    %v1992 = vsel %vm1981, %v1940, %v1991
    %v1993 = vsel %vm1983, %v1946, %v1992
    %v1994 = vsel %vm1985, %v1952, %v1993
    %v1995 = vsel %vm1987, %v1958, %v1994
    %1998 = vst [vmem:[#allocation12] sm:$0xff] %v1988
    %1999 = vst [vmem:[#allocation12 + $0x8] sm:$0xff] %v1995
    // Predicated region
    $region58: #{tpu_custom_call.1} parent=1 // pred_check
      _
    $region59: #{tpu_custom_call.1} parent=1 // pred_check_branch
      %2001 = sbr.rel (0) target = $region61
    $region60: #{tpu_custom_call.1} parent=1 // pred_region
      %2003 = vsyncadd [#allocation5], 0
      %s2004 = sshll.u32 [#allocation12], 4
      %s2005 = int_to_ptr.vmem [resolvable:$true] %s2004
      %s2006 = sshll.u32 %s9, 4
      %s2007 = int_to_ptr.hbm [resolvable:$true] %s2006
      %2012 = dma.vmem_to_hbm [thread:$0]  %s2005, 256, %s2007, [#allocation5], 128, 128, 8
    $region61: #{tpu_custom_call.1} parent=1 // pred_fallthru
      _
    // Predicated region
    $region62: #{tpu_custom_call.1} parent=1 // pred_check
      _
    $region63: #{tpu_custom_call.1} parent=1 // pred_check_branch
      %2014 = sbr.rel (0) target = $region65
    $region64: #{tpu_custom_call.1} parent=1 // pred_region
      %2016 = dma.done [#allocation5], 256
    $region65: #{tpu_custom_call.1} parent=1 // pred_fallthru
      _
    %2017 = vsyncpa [#allocation4], 1
    %2018 = vsyncpa [#allocation7], 1
    %2019 = vsyncpa [#allocation10], 1
    %2020 = vsyncpa [#allocation5], 1

</llo_original>
